<compile_context>
chip_gen: v7x
topology: tpu7x:2x2x1
jax: 0.10.0
libtpu: 0.0.40
codegen_flags: <defaults>
</compile_context>

<pallas_src>
import functools

import jax
import jax.numpy as jnp
from jax import lax
from jax.experimental import pallas as pl
from jax.experimental.pallas import tpu as pltpu


def _decoder_gru_kernel(
    emb_ref,     # (T, Bb, E)   target embeddings for this batch block
    h0_ref,      # (Bb, H)      initial hidden state
    ctx_ref,     # (Bb, S, H)   encoder context
    init_o_ref,  # (Bb, H)      initial decoder output (input feed)
    Wi_ref,      # (E[+H], 3H)  fused GRU input->gate weights, rows=[emb ; feed], cols=r|z|n
    Wh_ref,      # (H, 3H)      fused GRU hidden->gate weights
    bi_ref,      # (1, 3H)      GRU input bias
    bh_ref,      # (1, 3H)      GRU hidden bias
    Win_ref,     # (H, H)       attention linear_in (pre-transposed: x @ Win)
    Wo_ref,      # (2H, H)      attention linear_out, rows = [weighted_ctx ; attn_input]
    out_ref,     # (T, Bb, H)   outputs
    hid_ref,     # (Bb, H)      final hidden
    attn_ref,    # (Bb, S)      last-step attention weights
    *,
    input_feed: bool,
):
    T, Bb, E = emb_ref.shape
    H = Wh_ref.shape[0]
    S = ctx_ref.shape[1]

    # Loop-invariant operands, loaded once before the recurrence.
    ctx = ctx_ref[...].astype(jnp.float32)          # (Bb, S, H)
    Wi = Wi_ref[...].astype(jnp.float32)
    Wh = Wh_ref[...].astype(jnp.float32)
    bi = bi_ref[...].astype(jnp.float32)
    bh = bh_ref[...].astype(jnp.float32)
    Win = Win_ref[...].astype(jnp.float32)
    Wo = Wo_ref[...].astype(jnp.float32)
    # Sublane-aligned row splits of the fused weights (equivalent to the
    # concatenated-input matmuls, without an in-kernel minor-dim concat).
    W_ie = Wi[:E]                                   # (E, 3H)
    W_if = Wi[E:] if input_feed else None           # (H, 3H)
    Wo_c = Wo[:H]                                   # (H, H)  weighted-context part
    Wo_h = Wo[H:]                                   # (H, H)  attn-input part

    def mm(a, b):
        return jnp.dot(a, b, preferred_element_type=jnp.float32)

    def step(t, carry):
        h, o_prev, _ = carry
        emb_t = emb_ref[t].astype(jnp.float32)      # (Bb, E)

        # --- fused GRU gates (PyTorch gate order along 3H axis: r | z | n) ---
        gi = mm(emb_t, W_ie) + bi
        if input_feed:
            gi = gi + mm(o_prev, W_if)
        gh = mm(h, Wh) + bh
        r = jax.nn.sigmoid(gi[:, :H] + gh[:, :H])
        z = jax.nn.sigmoid(gi[:, H:2 * H] + gh[:, H:2 * H])
        n = jnp.tanh(gi[:, 2 * H:] + r * gh[:, 2 * H:])
        h_new = (1.0 - z) * n + z * h               # (Bb, H)

        # --- GlobalAttention (mask never set -> no masking) ---
        target = mm(h_new, Win)                     # (Bb, H)
        # Batched MXU contractions (q == 1), flash-attention einsum pattern.
        scores = jnp.einsum('bqh,bsh->bqs', target[:, None, :], ctx,
                            preferred_element_type=jnp.float32)[:, 0, :]   # (Bb, S)
        m = jnp.max(scores, axis=-1, keepdims=True)
        e = jnp.exp(scores - m)
        attn = e * pl.reciprocal(jnp.sum(e, axis=-1, keepdims=True), approx=True)
        wc = jnp.einsum('bqs,bsh->bqh', attn[:, None, :], ctx,
                        preferred_element_type=jnp.float32)[:, 0, :]        # (Bb, H)
        # linear_out([weighted_context, attn_input]) + tanh; dropout(p=0) = id.
        ctx_out = jnp.tanh(mm(wc, Wo_c) + mm(h_new, Wo_h))

        out_ref[t] = ctx_out.astype(out_ref.dtype)
        return (h_new, ctx_out, attn)

    h0 = h0_ref[...].astype(jnp.float32)
    o0 = init_o_ref[...].astype(jnp.float32)
    attn0 = jnp.zeros((Bb, S), jnp.float32)
    h_fin, _o_fin, attn_fin = lax.fori_loop(0, T, step, (h0, o0, attn0))

    # Final-only outputs written exactly once, after the recurrence.
    hid_ref[...] = h_fin.astype(hid_ref.dtype)
    attn_ref[...] = attn_fin.astype(attn_ref.dtype)


def decoder_gru_forward(trg_input, hidden, context, init_output, params,
                        *, input_feed=True, block_b=None):
    """params = (Wi, Wh, bi, bh, Win, Wo) in the fused layout (see kernel docstring)."""
    Wi, Wh, bi, bh, Win, Wo = params
    T, B, E = trg_input.shape
    _, S, H = context.shape
    h0 = hidden.reshape(B, H)

    if block_b is None:
        block_b = B     # single batch block; on v7x pass block_b = B//2
                        # (a multiple of 8) to shard batch over the 2 TCs.
    assert B % block_b == 0
    nb = B // block_b

    kernel = functools.partial(_decoder_gru_kernel, input_feed=input_feed)

    def wfull(shape):
        zeros = (0,) * len(shape)
        return pl.BlockSpec(shape, lambda b: zeros)

    grid_spec = pltpu.PrefetchScalarGridSpec(
        num_scalar_prefetch=0,
        grid=(nb,),   # batch blocks only; the T recurrence is inside the kernel
        in_specs=[
            pl.BlockSpec((T, block_b, E), lambda b: (0, b, 0)),   # trg_input
            pl.BlockSpec((block_b, H), lambda b: (b, 0)),         # h0
            pl.BlockSpec((block_b, S, H), lambda b: (b, 0, 0)),   # context
            pl.BlockSpec((block_b, H), lambda b: (b, 0)),         # init_output
            wfull(Wi.shape),
            wfull(Wh.shape),
            wfull(bi.shape),
            wfull(bh.shape),
            wfull(Win.shape),
            wfull(Wo.shape),
        ],
        out_specs=[
            pl.BlockSpec((T, block_b, H), lambda b: (0, b, 0)),   # outputs
            pl.BlockSpec((block_b, H), lambda b: (b, 0)),         # final hidden
            pl.BlockSpec((block_b, S), lambda b: (b, 0)),         # last attn
        ],
    )

    outputs, hid, attn = pl.pallas_call(
        kernel,
        out_shape=(
            jax.ShapeDtypeStruct((T, B, H), jnp.float32),
            jax.ShapeDtypeStruct((B, H), jnp.float32),
            jax.ShapeDtypeStruct((B, S), jnp.float32),
        ),
        grid_spec=grid_spec,
        compiler_params=pltpu.CompilerParams(
            dimension_semantics=("parallel",),   # batch blocks are independent
        ),
    )(trg_input, h0, context, init_output, Wi, Wh, bi, bh, Win, Wo)

    return outputs, hid.reshape(1, B, H), attn


def fuse_pytorch_params(weight_ih, weight_hh, bias_ih, bias_hh,
                        linear_in_w, linear_out_w):
    """Convert PyTorch DecoderGRU parameters to the fused kernel layout.

    weight_ih    : (3H, E[+H])  nn.GRU weight_ih_l0   (gate order r, z, n)
    weight_hh    : (3H, H)      nn.GRU weight_hh_l0
    bias_ih      : (3H,)        nn.GRU bias_ih_l0
    bias_hh      : (3H,)        nn.GRU bias_hh_l0
    linear_in_w  : (H, H)       GlobalAttention.linear_in.weight
    linear_out_w : (H, 2H)      GlobalAttention.linear_out.weight
    """
    Wi = weight_ih.T            # (E[+H], 3H)
    Wh = weight_hh.T            # (H, 3H)
    bi = bias_ih.reshape(1, -1)
    bh = bias_hh.reshape(1, -1)
    Win = linear_in_w.T         # (H, H)
    Wo = linear_out_w.T         # (2H, H), rows = [weighted_ctx ; attn_input]
    return Wi, Wh, bi, bh, Win, Wo


def decoder_gru_reference(trg_input, hidden, context, init_output, params,
                          *, input_feed=True):
    """Pure-JAX reference with identical math (for validation)."""
    Wi, Wh, bi, bh, Win, Wo = params
    H = hidden.shape[-1]
    h = hidden[0]
    o = init_output
    outs = []
    attn = None
    for t in range(trg_input.shape[0]):
        emb = trg_input[t]
        x = jnp.concatenate([emb, o], axis=1) if input_feed else emb
        gi = x @ Wi + bi
        gh = h @ Wh + bh
        r = jax.nn.sigmoid(gi[:, :H] + gh[:, :H])
        z = jax.nn.sigmoid(gi[:, H:2 * H] + gh[:, H:2 * H])
        n = jnp.tanh(gi[:, 2 * H:] + r * gh[:, 2 * H:])
        h = (1.0 - z) * n + z * h
        tgt = h @ Win
        scores = jnp.einsum('bsh,bh->bs', context, tgt)
        attn = jax.nn.softmax(scores, axis=-1)
        wc = jnp.einsum('bs,bsh->bh', attn, context)
        o = jnp.tanh(jnp.concatenate([wc, h], axis=1) @ Wo)
        outs.append(o)
    return jnp.stack(outs), h[None], attn


if __name__ == "__main__":
    # Small shapes consistent with the module's forward.
    T, B, E, H, S = 8, 4, 16, 32, 8      # trg_seqL, batch, emb_dim, hidden, sourceL
    input_feed = True

    key = jax.random.PRNGKey(0)
    ks = jax.random.split(key, 10)
    f32 = jnp.float32
    sc = 0.1

    trg_input = jax.random.normal(ks[0], (T, B, E), f32)
    hidden = jax.random.normal(ks[1], (1, B, H), f32)
    context = jax.random.normal(ks[2], (B, S, H), f32)
    init_output = jax.random.normal(ks[3], (B, H), f32)

    in_sz = E + H if input_feed else E
    params = fuse_pytorch_params(
        sc * jax.random.normal(ks[4], (3 * H, in_sz), f32),   # GRU weight_ih
        sc * jax.random.normal(ks[5], (3 * H, H), f32),       # GRU weight_hh
        sc * jax.random.normal(ks[6], (3 * H,), f32),          # GRU bias_ih
        sc * jax.random.normal(ks[7], (3 * H,), f32),          # GRU bias_hh
        sc * jax.random.normal(ks[8], (H, H), f32),            # attn linear_in
        sc * jax.random.normal(ks[9], (H, 2 * H), f32),        # attn linear_out
    )

    outputs, hid, attn = decoder_gru_forward(
        trg_input, hidden, context, init_output, params, input_feed=input_feed)
    jax.block_until_ready((outputs, hid, attn))

    ref_out, ref_hid, ref_attn = decoder_gru_reference(
        trg_input, hidden, context, init_output, params, input_feed=input_feed)

    # Slightly loosened tolerance: the in-kernel softmax uses the EUP's
    # approximate reciprocal (pl.reciprocal(..., approx=True)).
    assert jnp.allclose(outputs, ref_out, atol=2e-3, rtol=2e-3)
    assert jnp.allclose(hid, ref_hid, atol=2e-3, rtol=2e-3)
    assert jnp.allclose(attn, ref_attn, atol=2e-3, rtol=2e-3)

    print("KERNEL_OK")
</pallas_src>

<mosaic_0001>
module attributes {stable_mosaic.version = 11 : i64} {
  func.func @_decoder_gru_kernel(%arg0: i32, %arg1: memref<8x4x16xf32, #tpu.memory_space<vmem>>, %arg2: memref<4x32xf32, #tpu.memory_space<vmem>>, %arg3: memref<4x8x32xf32, #tpu.memory_space<vmem>>, %arg4: memref<4x32xf32, #tpu.memory_space<vmem>>, %arg5: memref<48x96xf32, #tpu.memory_space<vmem>>, %arg6: memref<32x96xf32, #tpu.memory_space<vmem>>, %arg7: memref<1x96xf32, #tpu.memory_space<vmem>>, %arg8: memref<1x96xf32, #tpu.memory_space<vmem>>, %arg9: memref<32x32xf32, #tpu.memory_space<vmem>>, %arg10: memref<64x32xf32, #tpu.memory_space<vmem>>, %arg11: memref<8x4x32xf32, #tpu.memory_space<vmem>>, %arg12: memref<4x32xf32, #tpu.memory_space<vmem>>, %arg13: memref<4x8xf32, #tpu.memory_space<vmem>>) attributes {dimension_semantics = [#tpu.dimension_semantics<parallel>], iteration_bounds = array<i64: 1>, scalar_prefetch = 0 : i64, scratch_operands = 0 : i64, tpu.core_type = #tpu.core_type<tc>, window_params = [{transform_indices = @transform_0, window_bounds = array<i64: 8, 4, 16>}, {transform_indices = @transform_1, window_bounds = array<i64: 4, 32>}, {transform_indices = @transform_2, window_bounds = array<i64: 4, 8, 32>}, {transform_indices = @transform_3, window_bounds = array<i64: 4, 32>}, {pipeline_mode = #tpu.pipeline_mode<synchronous>, transform_indices = @transform_4, window_bounds = array<i64: 48, 96>}, {pipeline_mode = #tpu.pipeline_mode<synchronous>, transform_indices = @transform_5, window_bounds = array<i64: 32, 96>}, {pipeline_mode = #tpu.pipeline_mode<synchronous>, transform_indices = @transform_6, window_bounds = array<i64: 1, 96>}, {pipeline_mode = #tpu.pipeline_mode<synchronous>, transform_indices = @transform_7, window_bounds = array<i64: 1, 96>}, {pipeline_mode = #tpu.pipeline_mode<synchronous>, transform_indices = @transform_8, window_bounds = array<i64: 32, 32>}, {pipeline_mode = #tpu.pipeline_mode<synchronous>, transform_indices = @transform_9, window_bounds = array<i64: 64, 32>}, {transform_indices = @transform_10, window_bounds = array<i64: 8, 4, 32>}, {transform_indices = @transform_11, window_bounds = array<i64: 4, 32>}, {transform_indices = @transform_12, window_bounds = array<i64: 4, 8>}]} {
    %c0 = arith.constant 0 : index
    %c0_0 = arith.constant 0 : index
    %c0_1 = arith.constant 0 : index
    %0 = vector.load %arg3[%c0, %c0_0, %c0_1] : memref<4x8x32xf32, #tpu.memory_space<vmem>>, vector<4x8x32xf32>
    %c0_2 = arith.constant 0 : index
    %c0_3 = arith.constant 0 : index
    %1 = vector.load %arg5[%c0_2, %c0_3] : memref<48x96xf32, #tpu.memory_space<vmem>>, vector<48x96xf32>
    %c0_4 = arith.constant 0 : index
    %c0_5 = arith.constant 0 : index
    %2 = vector.load %arg6[%c0_4, %c0_5] : memref<32x96xf32, #tpu.memory_space<vmem>>, vector<32x96xf32>
    %c0_6 = arith.constant 0 : index
    %c0_7 = arith.constant 0 : index
    %3 = vector.load %arg7[%c0_6, %c0_7] : memref<1x96xf32, #tpu.memory_space<vmem>>, vector<1x96xf32>
    %c0_8 = arith.constant 0 : index
    %c0_9 = arith.constant 0 : index
    %4 = vector.load %arg8[%c0_8, %c0_9] : memref<1x96xf32, #tpu.memory_space<vmem>>, vector<1x96xf32>
    %c0_10 = arith.constant 0 : index
    %c0_11 = arith.constant 0 : index
    %5 = vector.load %arg9[%c0_10, %c0_11] : memref<32x32xf32, #tpu.memory_space<vmem>>, vector<32x32xf32>
    %c0_12 = arith.constant 0 : index
    %c0_13 = arith.constant 0 : index
    %6 = vector.load %arg10[%c0_12, %c0_13] : memref<64x32xf32, #tpu.memory_space<vmem>>, vector<64x32xf32>
    %7 = vector.extract_strided_slice %1 {offsets = [0, 0], sizes = [16, 96], strides = [1, 1]} : vector<48x96xf32> to vector<16x96xf32>
    %8 = vector.extract_strided_slice %1 {offsets = [16, 0], sizes = [32, 96], strides = [1, 1]} : vector<48x96xf32> to vector<32x96xf32>
    %9 = vector.extract_strided_slice %6 {offsets = [0, 0], sizes = [32, 32], strides = [1, 1]} : vector<64x32xf32> to vector<32x32xf32>
    %10 = vector.extract_strided_slice %6 {offsets = [32, 0], sizes = [32, 32], strides = [1, 1]} : vector<64x32xf32> to vector<32x32xf32>
    %c0_14 = arith.constant 0 : index
    %c0_15 = arith.constant 0 : index
    %11 = vector.load %arg2[%c0_14, %c0_15] : memref<4x32xf32, #tpu.memory_space<vmem>>, vector<4x32xf32>
    %c0_16 = arith.constant 0 : index
    %c0_17 = arith.constant 0 : index
    %12 = vector.load %arg4[%c0_16, %c0_17] : memref<4x32xf32, #tpu.memory_space<vmem>>, vector<4x32xf32>
    %cst = arith.constant 0.000000e+00 : f32
    %13 = vector.broadcast %cst : f32 to vector<4x8xf32>
    %c0_i32 = arith.constant 0 : i32
    %c8_i32 = arith.constant 8 : i32
    %14 = arith.addi %c0_i32, %c8_i32 : i32
    %c1_i32 = arith.constant 1 : i32
    %15:3 = scf.for %arg14 = %c0_i32 to %14 step %c1_i32 iter_args(%arg15 = %11, %arg16 = %12, %arg17 = %13) -> (vector<4x32xf32>, vector<4x32xf32>, vector<4x8xf32>)  : i32 {
      %18 = arith.index_cast %arg14 : i32 to index
      %c0_23 = arith.constant 0 : index
      %c0_24 = arith.constant 0 : index
      %19 = vector.load %arg1[%18, %c0_23, %c0_24] : memref<8x4x16xf32, #tpu.memory_space<vmem>>, vector<1x4x16xf32>
      %20 = vector.shape_cast %19 : vector<1x4x16xf32> to vector<4x16xf32>
      %cst_25 = arith.constant dense<0.000000e+00> : vector<4x96xf32>
      %21 = tpu.matmul %20, %7, %cst_25 {dimension_numbers = #tpu.dot_dimension_numbers<[1], [0], [0], [1], [0, 0, 1, 1], [], []>} : vector<4x16xf32>, vector<16x96xf32>, vector<4x96xf32> -> vector<4x96xf32>
      %22 = vector.broadcast %3 : vector<1x96xf32> to vector<4x96xf32>
      %23 = arith.addf %21, %22 : vector<4x96xf32>
      %cst_26 = arith.constant dense<0.000000e+00> : vector<4x96xf32>
      %24 = tpu.matmul %arg16, %8, %cst_26 {dimension_numbers = #tpu.dot_dimension_numbers<[1], [0], [0], [1], [0, 0, 1, 1], [], []>} : vector<4x32xf32>, vector<32x96xf32>, vector<4x96xf32> -> vector<4x96xf32>
      %25 = arith.addf %23, %24 : vector<4x96xf32>
      %cst_27 = arith.constant dense<0.000000e+00> : vector<4x96xf32>
      %26 = tpu.matmul %arg15, %2, %cst_27 {dimension_numbers = #tpu.dot_dimension_numbers<[1], [0], [0], [1], [0, 0, 1, 1], [], []>} : vector<4x32xf32>, vector<32x96xf32>, vector<4x96xf32> -> vector<4x96xf32>
      %27 = vector.broadcast %4 : vector<1x96xf32> to vector<4x96xf32>
      %28 = arith.addf %26, %27 : vector<4x96xf32>
      %29 = vector.extract_strided_slice %25 {offsets = [0, 0], sizes = [4, 32], strides = [1, 1]} : vector<4x96xf32> to vector<4x32xf32>
      %30 = vector.extract_strided_slice %28 {offsets = [0, 0], sizes = [4, 32], strides = [1, 1]} : vector<4x96xf32> to vector<4x32xf32>
      %31 = arith.addf %29, %30 : vector<4x32xf32>
      %32 = arith.negf %31 : vector<4x32xf32>
      %33 = math.exp %32 : vector<4x32xf32>
      %cst_28 = arith.constant 1.000000e+00 : f32
      %34 = vector.broadcast %cst_28 : f32 to vector<4x32xf32>
      %35 = arith.addf %34, %33 : vector<4x32xf32>
      %36 = arith.divf %34, %35 : vector<4x32xf32>
      %37 = vector.extract_strided_slice %25 {offsets = [0, 32], sizes = [4, 32], strides = [1, 1]} : vector<4x96xf32> to vector<4x32xf32>
      %38 = vector.extract_strided_slice %28 {offsets = [0, 32], sizes = [4, 32], strides = [1, 1]} : vector<4x96xf32> to vector<4x32xf32>
      %39 = arith.addf %37, %38 : vector<4x32xf32>
      %40 = arith.negf %39 : vector<4x32xf32>
      %41 = math.exp %40 : vector<4x32xf32>
      %cst_29 = arith.constant 1.000000e+00 : f32
      %42 = vector.broadcast %cst_29 : f32 to vector<4x32xf32>
      %43 = arith.addf %42, %41 : vector<4x32xf32>
      %44 = arith.divf %42, %43 : vector<4x32xf32>
      %45 = vector.extract_strided_slice %25 {offsets = [0, 64], sizes = [4, 32], strides = [1, 1]} : vector<4x96xf32> to vector<4x32xf32>
      %46 = vector.extract_strided_slice %28 {offsets = [0, 64], sizes = [4, 32], strides = [1, 1]} : vector<4x96xf32> to vector<4x32xf32>
      %47 = arith.mulf %36, %46 : vector<4x32xf32>
      %48 = arith.addf %45, %47 : vector<4x32xf32>
      %49 = math.tanh %48 : vector<4x32xf32>
      %cst_30 = arith.constant 1.000000e+00 : f32
      %50 = vector.broadcast %cst_30 : f32 to vector<4x32xf32>
      %51 = arith.subf %50, %44 : vector<4x32xf32>
      %52 = arith.mulf %51, %49 : vector<4x32xf32>
      %53 = arith.mulf %44, %arg15 : vector<4x32xf32>
      %54 = arith.addf %52, %53 : vector<4x32xf32>
      %cst_31 = arith.constant dense<0.000000e+00> : vector<4x32xf32>
      %55 = tpu.matmul %54, %5, %cst_31 {dimension_numbers = #tpu.dot_dimension_numbers<[1], [0], [0], [1], [0, 0, 1, 1], [], []>} : vector<4x32xf32>, vector<32x32xf32>, vector<4x32xf32> -> vector<4x32xf32>
      %56 = vector.shape_cast %55 : vector<4x32xf32> to vector<4x1x32xf32>
      "tpu.trace_start"() <{level = 10 : i32, message = "bqh,bsh->bqs"}> : () -> ()
      %cst_32 = arith.constant dense<0.000000e+00> : vector<4x1x8xf32>
      %57 = tpu.matmul %56, %0, %cst_32 {dimension_numbers = #tpu.dot_dimension_numbers<[2], [2], [1], [1], [0, 0, 0, 1, 1, 1], [0], [0]>} : vector<4x1x32xf32>, vector<4x8x32xf32>, vector<4x1x8xf32> -> vector<4x1x8xf32>
      "tpu.trace_stop"() : () -> ()
      %58 = vector.shape_cast %57 : vector<4x1x8xf32> to vector<4x8xf32>
      %cst_33 = arith.constant dense<0xFF800000> : vector<4xf32>
      %59 = vector.multi_reduction <maximumf>, %58, %cst_33 [1] : vector<4x8xf32> to vector<4xf32>
      %60 = vector.shape_cast %59 : vector<4xf32> to vector<4x1xf32>
      %61 = vector.broadcast %60 : vector<4x1xf32> to vector<4x8xf32>
      %62 = arith.subf %58, %61 : vector<4x8xf32>
      %63 = math.exp %62 : vector<4x8xf32>
      %cst_34 = arith.constant dense<0.000000e+00> : vector<4xf32>
      %64 = vector.multi_reduction <add>, %63, %cst_34 [1] : vector<4x8xf32> to vector<4xf32>
      %65 = vector.shape_cast %64 : vector<4xf32> to vector<4x1xf32>
      %66 = tpu.reciprocal %65 {approx = true} : vector<4x1xf32> -> vector<4x1xf32>
      %67 = vector.broadcast %66 : vector<4x1xf32> to vector<4x8xf32>
      %68 = arith.mulf %63, %67 : vector<4x8xf32>
      %69 = vector.shape_cast %68 : vector<4x8xf32> to vector<4x1x8xf32>
      "tpu.trace_start"() <{level = 10 : i32, message = "bqs,bsh->bqh"}> : () -> ()
      %cst_35 = arith.constant dense<0.000000e+00> : vector<4x1x32xf32>
      %70 = tpu.matmul %69, %0, %cst_35 {dimension_numbers = #tpu.dot_dimension_numbers<[2], [1], [1], [2], [0, 0, 0, 1, 1, 2], [0], [0]>} : vector<4x1x8xf32>, vector<4x8x32xf32>, vector<4x1x32xf32> -> vector<4x1x32xf32>
      "tpu.trace_stop"() : () -> ()
      %71 = vector.shape_cast %70 : vector<4x1x32xf32> to vector<4x32xf32>
      %cst_36 = arith.constant dense<0.000000e+00> : vector<4x32xf32>
      %72 = tpu.matmul %71, %9, %cst_36 {dimension_numbers = #tpu.dot_dimension_numbers<[1], [0], [0], [1], [0, 0, 1, 1], [], []>} : vector<4x32xf32>, vector<32x32xf32>, vector<4x32xf32> -> vector<4x32xf32>
      %cst_37 = arith.constant dense<0.000000e+00> : vector<4x32xf32>
      %73 = tpu.matmul %54, %10, %cst_37 {dimension_numbers = #tpu.dot_dimension_numbers<[1], [0], [0], [1], [0, 0, 1, 1], [], []>} : vector<4x32xf32>, vector<32x32xf32>, vector<4x32xf32> -> vector<4x32xf32>
      %74 = arith.addf %72, %73 : vector<4x32xf32>
      %75 = math.tanh %74 : vector<4x32xf32>
      %76 = arith.index_cast %arg14 : i32 to index
      %c0_38 = arith.constant 0 : index
      %c0_39 = arith.constant 0 : index
      %77 = vector.load %arg11[%76, %c0_38, %c0_39] : memref<8x4x32xf32, #tpu.memory_space<vmem>>, vector<1x4x32xf32>
      %78 = vector.shape_cast %77 : vector<1x4x32xf32> to vector<4x32xf32>
      %79 = vector.shape_cast %75 : vector<4x32xf32> to vector<1x4x32xf32>
      tpu.vector_store %arg11[%76, %c0_38, %c0_39], %79 {strides = array<i32>} : memref<8x4x32xf32, #tpu.memory_space<vmem>>, vector<1x4x32xf32>,
      scf.yield %54, %75, %68 : vector<4x32xf32>, vector<4x32xf32>, vector<4x8xf32>
    }
    %c8_i32_18 = arith.constant 8 : i32
    %c0_19 = arith.constant 0 : index
    %c0_20 = arith.constant 0 : index
    %16 = vector.load %arg12[%c0_19, %c0_20] : memref<4x32xf32, #tpu.memory_space<vmem>>, vector<4x32xf32>
    tpu.vector_store %arg12[%c0_19, %c0_20], %15#0 {strides = array<i32>} : memref<4x32xf32, #tpu.memory_space<vmem>>, vector<4x32xf32>,
    %c0_21 = arith.constant 0 : index
    %c0_22 = arith.constant 0 : index
    %17 = vector.load %arg13[%c0_21, %c0_22] : memref<4x8xf32, #tpu.memory_space<vmem>>, vector<4x8xf32>
    tpu.vector_store %arg13[%c0_21, %c0_22], %15#2 {strides = array<i32>} : memref<4x8xf32, #tpu.memory_space<vmem>>, vector<4x8xf32>,
    return
  }
  func.func @transform_0(%arg0: i32) -> (i32, i32, i32) {
    %c0_i32 = arith.constant 0 : i32
    %c0_i32_0 = arith.constant 0 : i32
    %c0_i32_1 = arith.constant 0 : i32
    return %c0_i32, %arg0, %c0_i32_0 : i32, i32, i32
  }
  func.func @transform_1(%arg0: i32) -> (i32, i32) {
    %c0_i32 = arith.constant 0 : i32
    %c0_i32_0 = arith.constant 0 : i32
    return %arg0, %c0_i32 : i32, i32
  }
  func.func @transform_2(%arg0: i32) -> (i32, i32, i32) {
    %c0_i32 = arith.constant 0 : i32
    %c0_i32_0 = arith.constant 0 : i32
    %c0_i32_1 = arith.constant 0 : i32
    return %arg0, %c0_i32, %c0_i32_0 : i32, i32, i32
  }
  func.func @transform_3(%arg0: i32) -> (i32, i32) {
    %c0_i32 = arith.constant 0 : i32
    %c0_i32_0 = arith.constant 0 : i32
    return %arg0, %c0_i32 : i32, i32
  }
  func.func @transform_4(%arg0: i32) -> (i32, i32) {
    %c0_i32 = arith.constant 0 : i32
    %c0_i32_0 = arith.constant 0 : i32
    %c0_i32_1 = arith.constant 0 : i32
    return %c0_i32, %c0_i32_0 : i32, i32
  }
  func.func @transform_5(%arg0: i32) -> (i32, i32) {
    %c0_i32 = arith.constant 0 : i32
    %c0_i32_0 = arith.constant 0 : i32
    %c0_i32_1 = arith.constant 0 : i32
    return %c0_i32, %c0_i32_0 : i32, i32
  }
  func.func @transform_6(%arg0: i32) -> (i32, i32) {
    %c0_i32 = arith.constant 0 : i32
    %c0_i32_0 = arith.constant 0 : i32
    %c0_i32_1 = arith.constant 0 : i32
    return %c0_i32, %c0_i32_0 : i32, i32
  }
  func.func @transform_7(%arg0: i32) -> (i32, i32) {
    %c0_i32 = arith.constant 0 : i32
    %c0_i32_0 = arith.constant 0 : i32
    %c0_i32_1 = arith.constant 0 : i32
    return %c0_i32, %c0_i32_0 : i32, i32
  }
  func.func @transform_8(%arg0: i32) -> (i32, i32) {
    %c0_i32 = arith.constant 0 : i32
    %c0_i32_0 = arith.constant 0 : i32
    %c0_i32_1 = arith.constant 0 : i32
    return %c0_i32, %c0_i32_0 : i32, i32
  }
  func.func @transform_9(%arg0: i32) -> (i32, i32) {
    %c0_i32 = arith.constant 0 : i32
    %c0_i32_0 = arith.constant 0 : i32
    %c0_i32_1 = arith.constant 0 : i32
    return %c0_i32, %c0_i32_0 : i32, i32
  }
  func.func @transform_10(%arg0: i32) -> (i32, i32, i32) {
    %c0_i32 = arith.constant 0 : i32
    %c0_i32_0 = arith.constant 0 : i32
    %c0_i32_1 = arith.constant 0 : i32
    return %c0_i32, %arg0, %c0_i32_0 : i32, i32, i32
  }
  func.func @transform_11(%arg0: i32) -> (i32, i32) {
    %c0_i32 = arith.constant 0 : i32
    %c0_i32_0 = arith.constant 0 : i32
    return %arg0, %c0_i32 : i32, i32
  }
  func.func @transform_12(%arg0: i32) -> (i32, i32) {
    %c0_i32 = arith.constant 0 : i32
    %c0_i32_0 = arith.constant 0 : i32
    return %arg0, %c0_i32 : i32, i32
  }
}

</mosaic_0001>

<llo_original>
// kernel: tpu_custom_call.1
$region0: #{tpu_custom_call.1}
  #allocation0 [shape = 'u32[]', space=smem, size = 0x4, offset = 0x4, fixed_abs, tag = 'smem constant byte address 0x4 - core index']
  #allocation1 [shape = 'u32[144,128]{1,0:T(1,128)}', space=vmem, size = 0x12000, scoped, tag = 'internal scratch']
  %s0 = inlined_call_operand.vmem [shape: f32[8,4,16], index: 0, kind: input, shape index: {}]
  %s1 = inlined_call_operand.vmem [shape: f32[4,32], index: 1, kind: input, shape index: {}]
  %s2 = inlined_call_operand.hbm [shape: f32[4,8,32], index: 2, kind: input, shape index: {}]
  %s3 = inlined_call_operand.vmem [shape: f32[4,32], index: 3, kind: input, shape index: {}]
  %s4 = inlined_call_operand.vmem [shape: f32[48,96], index: 4, kind: input, shape index: {}]
  %s5 = inlined_call_operand.hbm [shape: f32[32,96], index: 5, kind: input, shape index: {}]
  %s6 = inlined_call_operand.vmem [shape: f32[1,96], index: 6, kind: input, shape index: {}]
  %s7 = inlined_call_operand.vmem [shape: f32[1,96], index: 7, kind: input, shape index: {}]
  %s8 = inlined_call_operand.hbm [shape: f32[32,32], index: 8, kind: input, shape index: {}]
  %s9 = inlined_call_operand.vmem [shape: f32[64,32], index: 9, kind: input, shape index: {}]
  %s10 = inlined_call_operand.hbm [shape: f32[8,4,32], index: 10, kind: output, shape index: {0}]
  %s11 = inlined_call_operand.hbm [shape: f32[4,32], index: 11, kind: output, shape index: {1}]
  %s12 = inlined_call_operand.hbm [shape: f32[4,8], index: 12, kind: output, shape index: {2}]
  %13 = xla_tuple %s10, %s11, %s12
  %s14 = sld [smem:[#allocation0]]
  $region85: #{tpu_custom_call.1} parent=0
    _
  %s16 = ssub.s32 1, %s14
  %s17 = scalar_select 0, %s16, %s14
  $region1: #{tpu_custom_call.1} parent=0
    #allocation2 [shape = 'u8[16384]{0}', space=vmem, size = 0x4000, scoped, tag = 'input window, operand 2, single buffered']
    #allocation3 [shape = 's32[1]{0}', space=sflag, size = 0x4, scoped, tag = 'scoped memory for tpu_custom_call.1']
    #allocation4 [shape = 's32[1]{0}', space=sflag, size = 0x4, scoped, tag = 'scoped memory for tpu_custom_call.1']
    #allocation5 [shape = 'u8[16384]{0}', space=vmem, size = 0x4000, scoped, tag = 'input window, operand 5, single buffered']
    #allocation6 [shape = 's32[1]{0}', space=sflag, size = 0x4, scoped, tag = 'scoped memory for tpu_custom_call.1']
    #allocation7 [shape = 'u8[16384]{0}', space=vmem, size = 0x4000, scoped, tag = 'input window, operand 8, single buffered']
    #allocation8 [shape = 'u8[16384]{0}', space=vmem, size = 0x4000, scoped, tag = 'output window, operand 0, single buffered']
    #allocation9 [shape = 'u8[2048]{0}', space=vmem, size = 0x800, scoped, tag = 'output window, operand 1, single buffered']
    #allocation10 [shape = 's32[1]{0}', space=sflag, size = 0x4, scoped, tag = 'scoped memory for tpu_custom_call.1']
    #allocation11 [shape = 'u8[2048]{0}', space=vmem, size = 0x800, scoped, tag = 'output window, operand 2, single buffered']
    %18 = vsyncpa [#allocation3], 0
    %19 = vsyncpa [#allocation6], 0
    %20 = vsyncpa [#allocation4], 0
    %21 = vsyncpa [#allocation10], 0
    // Predicated region
    $region2: #{tpu_custom_call.1} parent=1 // pred_check
      _
    $region3: #{tpu_custom_call.1} parent=1 // pred_check_branch
      %23 = sbr.rel (0) target = $region5
    $region4: #{tpu_custom_call.1} parent=1 // pred_region
      _
    $region5: #{tpu_custom_call.1} parent=1 // pred_fallthru
      _
    // Predicated region
    $region6: #{tpu_custom_call.1} parent=1 // pred_check
      _
    $region7: #{tpu_custom_call.1} parent=1 // pred_check_branch
      %25 = sbr.rel (0) target = $region9
    $region8: #{tpu_custom_call.1} parent=1 // pred_region
      _
    $region9: #{tpu_custom_call.1} parent=1 // pred_fallthru
      _
    // Predicated region
    $region10: #{tpu_custom_call.1} parent=1 // pred_check
      _
    $region11: #{tpu_custom_call.1} parent=1 // pred_check_branch
      %27 = sbr.rel (0) target = $region13
    $region12: #{tpu_custom_call.1} parent=1 // pred_region
      %s29 = ssub.s32 512, 512
      %30 = vsyncadd [#allocation3], %s29
      %s31 = sshll.u32 [#allocation2], 4
      %s32 = int_to_ptr.vmem [resolvable:$true] %s31
      %37 = dma.hbm_to_vmem [thread:$0]  %s2, 512, %s32, [#allocation3], 128, 128, 8
    $region13: #{tpu_custom_call.1} parent=1 // pred_fallthru
      _
    // Predicated region
    $region14: #{tpu_custom_call.1} parent=1 // pred_check
      _
    $region15: #{tpu_custom_call.1} parent=1 // pred_check_branch
      %39 = sbr.rel (0) target = $region17
    $region16: #{tpu_custom_call.1} parent=1 // pred_region
      _
    $region17: #{tpu_custom_call.1} parent=1 // pred_fallthru
      _
    // Predicated region
    $region18: #{tpu_custom_call.1} parent=1 // pred_check
      _
    $region19: #{tpu_custom_call.1} parent=1 // pred_check_branch
      %41 = sbr.rel (0) target = $region21
    $region20: #{tpu_custom_call.1} parent=1 // pred_region
      _
    $region21: #{tpu_custom_call.1} parent=1 // pred_fallthru
      _
    // Predicated region
    $region22: #{tpu_custom_call.1} parent=1 // pred_check
      _
    $region23: #{tpu_custom_call.1} parent=1 // pred_check_branch
      %43 = sbr.rel (0) target = $region25
    $region24: #{tpu_custom_call.1} parent=1 // pred_region
      %s45 = ssub.s32 512, 512
      %46 = vsyncadd [#allocation6], %s45
      %s47 = sshll.u32 [#allocation5], 4
      %s48 = int_to_ptr.vmem [resolvable:$true] %s47
      %53 = dma.hbm_to_vmem [thread:$0]  %s5, 512, %s48, [#allocation6], 128, 128, 8
    $region25: #{tpu_custom_call.1} parent=1 // pred_fallthru
      _
    // Predicated region
    $region26: #{tpu_custom_call.1} parent=1 // pred_check
      _
    $region27: #{tpu_custom_call.1} parent=1 // pred_check_branch
      %55 = sbr.rel (0) target = $region29
    $region28: #{tpu_custom_call.1} parent=1 // pred_region
      _
    $region29: #{tpu_custom_call.1} parent=1 // pred_fallthru
      _
    // Predicated region
    $region30: #{tpu_custom_call.1} parent=1 // pred_check
      _
    $region31: #{tpu_custom_call.1} parent=1 // pred_check_branch
      %57 = sbr.rel (0) target = $region33
    $region32: #{tpu_custom_call.1} parent=1 // pred_region
      _
    $region33: #{tpu_custom_call.1} parent=1 // pred_fallthru
      _
    // Predicated region
    $region34: #{tpu_custom_call.1} parent=1 // pred_check
      _
    $region35: #{tpu_custom_call.1} parent=1 // pred_check_branch
      %59 = sbr.rel (0) target = $region37
    $region36: #{tpu_custom_call.1} parent=1 // pred_region
      %s61 = ssub.s32 512, 512
      %62 = vsyncadd [#allocation6], %s61
      %s63 = sshll.u32 [#allocation7], 4
      %s64 = int_to_ptr.vmem [resolvable:$true] %s63
      %69 = dma.hbm_to_vmem [thread:$0]  %s8, 512, %s64, [#allocation6], 128, 128, 8
    $region37: #{tpu_custom_call.1} parent=1 // pred_fallthru
      _
    // Predicated region
    $region38: #{tpu_custom_call.1} parent=1 // pred_check
      _
    $region39: #{tpu_custom_call.1} parent=1 // pred_check_branch
      %71 = sbr.rel (0) target = $region41
    $region40: #{tpu_custom_call.1} parent=1 // pred_region
      _
    $region41: #{tpu_custom_call.1} parent=1 // pred_fallthru
      _
    // Predicated region
    $region42: #{tpu_custom_call.1} parent=1 // pred_check
      _
    $region43: #{tpu_custom_call.1} parent=1 // pred_check_branch
      %73 = sbr.rel (0) target = $region45
    $region44: #{tpu_custom_call.1} parent=1 // pred_region
      %74 = dma.done [#allocation3], 512
    $region45: #{tpu_custom_call.1} parent=1 // pred_fallthru
      _
    // Predicated region
    $region46: #{tpu_custom_call.1} parent=1 // pred_check
      _
    $region47: #{tpu_custom_call.1} parent=1 // pred_check_branch
      %76 = sbr.rel (0) target = $region49
    $region48: #{tpu_custom_call.1} parent=1 // pred_region
      %77 = dma.done [#allocation6], 512
    $region49: #{tpu_custom_call.1} parent=1 // pred_fallthru
      _
    // Predicated region
    $region50: #{tpu_custom_call.1} parent=1 // pred_check
      _
    $region51: #{tpu_custom_call.1} parent=1 // pred_check_branch
      %79 = sbr.rel (0) target = $region53
    $region52: #{tpu_custom_call.1} parent=1 // pred_region
      %80 = dma.done [#allocation6], 512
    $region53: #{tpu_custom_call.1} parent=1 // pred_fallthru
      _
    %v81 = vld [vmem:[#allocation2] sm:$0xff]
    %v82 = vld [vmem:[#allocation2 + $0x8] sm:$0xff]
    %v83 = vld [vmem:[#allocation2 + $0x10] sm:$0xff]
    %v84 = vld [vmem:[#allocation2 + $0x18] sm:$0xff]
    %v85 = vld [vmem:[%s4] sm:$0xff]
    %v86 = vld [vmem:[%s4 + $0x8] sm:$0xff]
    %v87 = vld [vmem:[%s4 + $0x10] sm:$0xff]
    %v88 = vld [vmem:[%s4 + $0x18] sm:$0xff]
    %v89 = vld [vmem:[%s4 + $0x20] sm:$0xff]
    %v90 = vld [vmem:[%s4 + $0x28] sm:$0xff]
    %v91 = vld [vmem:[#allocation5] sm:$0xff]
    %v92 = vld [vmem:[#allocation5 + $0x8] sm:$0xff]
    %v93 = vld [vmem:[#allocation5 + $0x10] sm:$0xff]
    %v94 = vld [vmem:[#allocation5 + $0x18] sm:$0xff]
    %v95 = vld [vmem:[%s6] sm:$0x1]
    %v96 = vld [vmem:[%s7] sm:$0x1]
    %v97 = vld [vmem:[#allocation7] sm:$0xff]
    %v98 = vld [vmem:[#allocation7 + $0x8] sm:$0xff]
    %v99 = vld [vmem:[#allocation7 + $0x10] sm:$0xff]
    %v100 = vld [vmem:[#allocation7 + $0x18] sm:$0xff]
    %v101 = vld [vmem:[%s9] sm:$0xff]
    %v102 = vld [vmem:[%s9 + $0x8] sm:$0xff]
    %v103 = vld [vmem:[%s9 + $0x10] sm:$0xff]
    %v104 = vld [vmem:[%s9 + $0x18] sm:$0xff]
    %v105 = vld [vmem:[%s9 + $0x20] sm:$0xff]
    %v106 = vld [vmem:[%s9 + $0x28] sm:$0xff]
    %v107 = vld [vmem:[%s9 + $0x30] sm:$0xff]
    %v108 = vld [vmem:[%s9 + $0x38] sm:$0xff]
    %v109 = vld [vmem:[%s1] sm:$0xf]
    %v110 = vld [vmem:[%s3] sm:$0xf]
    loop: start=0, step=1, limit=8
    $region54: #{tpu_custom_call.1} parent=1 // loop_pre_header
      _
    $region55: #{tpu_custom_call.1} parent=1 // loop_header
      %s112 = sphi 0, %s116
      %p113 = scmp.ge.s32.totalorder %s112, 8
      %v117 = vphi %v109, %v391
      %v118 = vphi %v110, %v1299
      %v119 = vphi 0.0, %v850
      %v120 = vphi 0.0, %v851
      %v121 = vphi 0.0, %v852
      %v122 = vphi 0.0, %v853
    $region56: #{tpu_custom_call.1} parent=1 // loop_header_branch
      %115 = sbr.rel (%p113) target = $region60
    $region57: #{tpu_custom_call.1} parent=1 // loop_body
      %s123 = smul.u32 %s112, 4
      %s124 = scalar_lea.vmem %s0, %s123
      %v125 = vld [vmem:[%s124] sm:$0xf]
      %v127 = vlaneseq
      %v128 = vshrl.u32 %v127, 7
      %v129 = vsub.s32 0, %v128
      %v130 = vrot.slane %v95, %v129
      %vm132 = vcmask 130048
      %v134 = vsel %vm132, %v125, 0
      %136 = vmatprep.subr.mxu0 0.0
      %137 = vmatpush1.msra.mxu0 %v85
      %138 = vmatprep.subr.mxu0 0.0
      %139 = vmatpush1.msra.mxu0 %v86
      %140 = vmatprep.subr.mxu0 0.0
      %141 = vmatpush1.msra.mxu0 0.0
      %142 = vmatprep.subr.mxu0 0.0
      %143 = vmatpush1.msra.mxu0 0.0
      %144 = vmatprep.subr.mxu0 0.0
      %145 = vmatpush1.msra.mxu0 0.0
      %146 = vmatprep.subr.mxu0 0.0
      %147 = vmatpush1.msra.mxu0 0.0
      %148 = vmatprep.subr.mxu0 0.0
      %149 = vmatpush1.msra.mxu0 0.0
      %150 = vmatprep.subr.mxu0 0.0
      %151 = vmatpush1.msra.mxu0 0.0
      %152 = vmatprep.subr.mxu0 0.0
      %153 = vmatpush1.msra.mxu0 0.0
      %154 = vmatprep.subr.mxu0 0.0
      %155 = vmatpush1.msra.mxu0 0.0
      %156 = vmatprep.subr.mxu0 0.0
      %157 = vmatpush1.msra.mxu0 0.0
      %158 = vmatprep.subr.mxu0 0.0
      %159 = vmatpush1.msra.mxu0 0.0
      %160 = vmatprep.subr.mxu0 0.0
      %161 = vmatpush1.msra.mxu0 0.0
      %162 = vmatprep.subr.mxu0 0.0
      %163 = vmatpush1.msra.mxu0 0.0
      %164 = vmatprep.subr.mxu0 0.0
      %165 = vmatpush1.msra.mxu0 0.0
      %166 = vmatprep.subr.mxu0 0.0
      %167 = vmatpush1.msra.mxu0 0.0
      %168 = vmatprep.subr.mxu0 0.0
      %169 = vmatpush1.msra.mxu0 0.0
      %170 = vmatprep.subr.mxu0 0.0
      %171 = vmatpush1.msra.mxu0 0.0
      %172 = vmatprep.subr.mxu0 0.0
      %173 = vmatpush1.msra.mxu0 0.0
      %174 = vmatprep.subr.mxu0 0.0
      %175 = vmatpush1.msra.mxu0 0.0
      %176 = vmatprep.subr.mxu0 0.0
      %177 = vmatpush1.msra.mxu0 0.0
      %178 = vmatprep.subr.mxu0 0.0
      %179 = vmatpush1.msra.mxu0 0.0
      %180 = vmatprep.subr.mxu0 0.0
      %181 = vmatpush1.msra.mxu0 0.0
      %182 = vmatprep.subr.mxu0 0.0
      %183 = vmatpush1.msra.mxu0 0.0
      %184 = vmatprep.subr.mxu0 0.0
      %185 = vmatpush1.msra.mxu0 0.0
      %186 = vmatprep.subr.mxu0 0.0
      %187 = vmatpush1.msra.mxu0 0.0
      %188 = vmatprep.subr.mxu0 0.0
      %189 = vmatpush1.msra.mxu0 0.0
      %190 = vmatprep.subr.mxu0 0.0
      %191 = vmatpush1.msra.mxu0 0.0
      %192 = vmatprep.subr.mxu0 0.0
      %193 = vmatpush1.msra.mxu0 0.0
      %194 = vmatprep.subr.mxu0 0.0
      %195 = vmatpush1.msra.mxu0 0.0
      %196 = vmatprep.subr.mxu0 0.0
      %197 = vmatpush1.msra.mxu0 0.0
      %198 = vmatprep.subr.mxu0 0.0
      %199 = vmatpush1.msra.mxu0 0.0
      %200 = vmatprep.mubr.f32.mxu0 0.0
      %201 = vmatmul.mubr.f32.gmra.mrb[0].mxu0 %v134
      %v202 = vpop.f32.mrb[0].mxu0
      %v203 = vadd.f32 %v130, %v202
      %v204 = vpop.f32.mrb[0].mxu0
      %205 = vdwg.mxu0
      %vm206 = vcmask 261120
      %v208 = vsel %vm206, %v118, 0
      %210 = vmatprep.subr.mxu0 0.0
      %211 = vmatpush1.msra.mxu0 %v87
      %212 = vmatprep.subr.mxu0 0.0
      %213 = vmatpush1.msra.mxu0 %v88
      %214 = vmatprep.subr.mxu0 0.0
      %215 = vmatpush1.msra.mxu0 %v89
      %216 = vmatprep.subr.mxu0 0.0
      %217 = vmatpush1.msra.mxu0 %v90
      %218 = vmatprep.subr.mxu0 0.0
      %219 = vmatpush1.msra.mxu0 0.0
      %220 = vmatprep.subr.mxu0 0.0
      %221 = vmatpush1.msra.mxu0 0.0
      %222 = vmatprep.subr.mxu0 0.0
      %223 = vmatpush1.msra.mxu0 0.0
      %224 = vmatprep.subr.mxu0 0.0
      %225 = vmatpush1.msra.mxu0 0.0
      %226 = vmatprep.subr.mxu0 0.0
      %227 = vmatpush1.msra.mxu0 0.0
      %228 = vmatprep.subr.mxu0 0.0
      %229 = vmatpush1.msra.mxu0 0.0
      %230 = vmatprep.subr.mxu0 0.0
      %231 = vmatpush1.msra.mxu0 0.0
      %232 = vmatprep.subr.mxu0 0.0
      %233 = vmatpush1.msra.mxu0 0.0
      %234 = vmatprep.subr.mxu0 0.0
      %235 = vmatpush1.msra.mxu0 0.0
      %236 = vmatprep.subr.mxu0 0.0
      %237 = vmatpush1.msra.mxu0 0.0
      %238 = vmatprep.subr.mxu0 0.0
      %239 = vmatpush1.msra.mxu0 0.0
      %240 = vmatprep.subr.mxu0 0.0
      %241 = vmatpush1.msra.mxu0 0.0
      %242 = vmatprep.subr.mxu0 0.0
      %243 = vmatpush1.msra.mxu0 0.0
      %244 = vmatprep.subr.mxu0 0.0
      %245 = vmatpush1.msra.mxu0 0.0
      %246 = vmatprep.subr.mxu0 0.0
      %247 = vmatpush1.msra.mxu0 0.0
      %248 = vmatprep.subr.mxu0 0.0
      %249 = vmatpush1.msra.mxu0 0.0
      %250 = vmatprep.subr.mxu0 0.0
      %251 = vmatpush1.msra.mxu0 0.0
      %252 = vmatprep.subr.mxu0 0.0
      %253 = vmatpush1.msra.mxu0 0.0
      %254 = vmatprep.subr.mxu0 0.0
      %255 = vmatpush1.msra.mxu0 0.0
      %256 = vmatprep.subr.mxu0 0.0
      %257 = vmatpush1.msra.mxu0 0.0
      %258 = vmatprep.subr.mxu0 0.0
      %259 = vmatpush1.msra.mxu0 0.0
      %260 = vmatprep.subr.mxu0 0.0
      %261 = vmatpush1.msra.mxu0 0.0
      %262 = vmatprep.subr.mxu0 0.0
      %263 = vmatpush1.msra.mxu0 0.0
      %264 = vmatprep.subr.mxu0 0.0
      %265 = vmatpush1.msra.mxu0 0.0
      %266 = vmatprep.subr.mxu0 0.0
      %267 = vmatpush1.msra.mxu0 0.0
      %268 = vmatprep.subr.mxu0 0.0
      %269 = vmatpush1.msra.mxu0 0.0
      %270 = vmatprep.subr.mxu0 0.0
      %271 = vmatpush1.msra.mxu0 0.0
      %272 = vmatprep.subr.mxu0 0.0
      %273 = vmatpush1.msra.mxu0 0.0
      %274 = vmatprep.mubr.f32.mxu0 0.0
      %275 = vmatmul.mubr.f32.gmra.mrb[0].mxu0 %v208
      %v276 = vpop.f32.mrb[0].mxu0
      %v277 = vadd.f32 0.0, %v276
      %v278 = vpop.f32.mrb[0].mxu0
      %279 = vdwg.mxu0
      %v280 = vadd.f32 %v203, %v277
      %v282 = vlaneseq
      %v283 = vshrl.u32 %v282, 7
      %v284 = vsub.s32 0, %v283
      %v285 = vrot.slane %v96, %v284
      %v288 = vsel %vm206, %v117, 0
      %290 = vmatprep.subr.mxu0 0.0
      %291 = vmatpush1.msra.mxu0 %v91
      %292 = vmatprep.subr.mxu0 0.0
      %293 = vmatpush1.msra.mxu0 %v92
      %294 = vmatprep.subr.mxu0 0.0
      %295 = vmatpush1.msra.mxu0 %v93
      %296 = vmatprep.subr.mxu0 0.0
      %297 = vmatpush1.msra.mxu0 %v94
      %298 = vmatprep.subr.mxu0 0.0
      %299 = vmatpush1.msra.mxu0 0.0
      %300 = vmatprep.subr.mxu0 0.0
      %301 = vmatpush1.msra.mxu0 0.0
      %302 = vmatprep.subr.mxu0 0.0
      %303 = vmatpush1.msra.mxu0 0.0
      %304 = vmatprep.subr.mxu0 0.0
      %305 = vmatpush1.msra.mxu0 0.0
      %306 = vmatprep.subr.mxu0 0.0
      %307 = vmatpush1.msra.mxu0 0.0
      %308 = vmatprep.subr.mxu0 0.0
      %309 = vmatpush1.msra.mxu0 0.0
      %310 = vmatprep.subr.mxu0 0.0
      %311 = vmatpush1.msra.mxu0 0.0
      %312 = vmatprep.subr.mxu0 0.0
      %313 = vmatpush1.msra.mxu0 0.0
      %314 = vmatprep.subr.mxu0 0.0
      %315 = vmatpush1.msra.mxu0 0.0
      %316 = vmatprep.subr.mxu0 0.0
      %317 = vmatpush1.msra.mxu0 0.0
      %318 = vmatprep.subr.mxu0 0.0
      %319 = vmatpush1.msra.mxu0 0.0
      %320 = vmatprep.subr.mxu0 0.0
      %321 = vmatpush1.msra.mxu0 0.0
      %322 = vmatprep.subr.mxu0 0.0
      %323 = vmatpush1.msra.mxu0 0.0
      %324 = vmatprep.subr.mxu0 0.0
      %325 = vmatpush1.msra.mxu0 0.0
      %326 = vmatprep.subr.mxu0 0.0
      %327 = vmatpush1.msra.mxu0 0.0
      %328 = vmatprep.subr.mxu0 0.0
      %329 = vmatpush1.msra.mxu0 0.0
      %330 = vmatprep.subr.mxu0 0.0
      %331 = vmatpush1.msra.mxu0 0.0
      %332 = vmatprep.subr.mxu0 0.0
      %333 = vmatpush1.msra.mxu0 0.0
      %334 = vmatprep.subr.mxu0 0.0
      %335 = vmatpush1.msra.mxu0 0.0
      %336 = vmatprep.subr.mxu0 0.0
      %337 = vmatpush1.msra.mxu0 0.0
      %338 = vmatprep.subr.mxu0 0.0
      %339 = vmatpush1.msra.mxu0 0.0
      %340 = vmatprep.subr.mxu0 0.0
      %341 = vmatpush1.msra.mxu0 0.0
      %342 = vmatprep.subr.mxu0 0.0
      %343 = vmatpush1.msra.mxu0 0.0
      %344 = vmatprep.subr.mxu0 0.0
      %345 = vmatpush1.msra.mxu0 0.0
      %346 = vmatprep.subr.mxu0 0.0
      %347 = vmatpush1.msra.mxu0 0.0
      %348 = vmatprep.subr.mxu0 0.0
      %349 = vmatpush1.msra.mxu0 0.0
      %350 = vmatprep.subr.mxu0 0.0
      %351 = vmatpush1.msra.mxu0 0.0
      %352 = vmatprep.subr.mxu0 0.0
      %353 = vmatpush1.msra.mxu0 0.0
      %354 = vmatprep.mubr.f32.mxu0 0.0
      %355 = vmatmul.mubr.f32.gmra.mrb[0].mxu0 %v288
      %v356 = vpop.f32.mrb[0].mxu0
      %v357 = vadd.f32 %v285, %v356
      %v358 = vpop.f32.mrb[0].mxu0
      %359 = vdwg.mxu0
      %v360 = vadd.f32 %v280, %v357
      %v361 = vxor.u32 %v360, 2147483648
      %v362 = vmul.f32 %v361, 1.442695
      %v363 = vpow.pop %v362
      %v364 = vadd.f32 %v363, 1.0
      %v365 = vrcp.pop %v364
      %v366 = vmul.f32 1.0, %v365
      %368 = vrot.lane.b32.xlu0 %v357, 64
      %v369 = vpop.permute.xlu0 %368
      %v371 = vmul.f32 %v366, %v369
      %373 = vrot.lane.b32.xlu0 %v371, 64
      %v374 = vpop.permute.xlu0 %373
      %v376 = vadd.f32 %v280, %v374
      %v377 = vtanh.pop %v376
      %v378 = vsub.f32 1.0, %v366
      %380 = vrot.lane.b32.xlu0 %v377, 96
      %v381 = vpop.permute.xlu0 %380
      %v383 = vmul.f32 %v378, %v381
      %384 = vrot.lane.b32.xlu0 %v117, 32
      %v385 = vpop.permute.xlu0 %384
      %v387 = vmul.f32 %v366, %v385
      %v388 = vadd.f32 %v383, %v387
      %390 = vrot.lane.b32.xlu0 %v388, 96
      %v391 = vpop.permute.xlu0 %390
      %v392 = vsel %vm206, %v391, 0
      %394 = vmatprep.subr.mxu0 0.0
      %395 = vmatpush1.msra.mxu0 %v97
      %396 = vmatprep.subr.mxu0 0.0
      %397 = vmatpush1.msra.mxu0 %v98
      %398 = vmatprep.subr.mxu0 0.0
      %399 = vmatpush1.msra.mxu0 %v99
      %400 = vmatprep.subr.mxu0 0.0
      %401 = vmatpush1.msra.mxu0 %v100
      %402 = vmatprep.subr.mxu0 0.0
      %403 = vmatpush1.msra.mxu0 0.0
      %404 = vmatprep.subr.mxu0 0.0
      %405 = vmatpush1.msra.mxu0 0.0
      %406 = vmatprep.subr.mxu0 0.0
      %407 = vmatpush1.msra.mxu0 0.0
      %408 = vmatprep.subr.mxu0 0.0
      %409 = vmatpush1.msra.mxu0 0.0
      %410 = vmatprep.subr.mxu0 0.0
      %411 = vmatpush1.msra.mxu0 0.0
      %412 = vmatprep.subr.mxu0 0.0
      %413 = vmatpush1.msra.mxu0 0.0
      %414 = vmatprep.subr.mxu0 0.0
      %415 = vmatpush1.msra.mxu0 0.0
      %416 = vmatprep.subr.mxu0 0.0
      %417 = vmatpush1.msra.mxu0 0.0
      %418 = vmatprep.subr.mxu0 0.0
      %419 = vmatpush1.msra.mxu0 0.0
      %420 = vmatprep.subr.mxu0 0.0
      %421 = vmatpush1.msra.mxu0 0.0
      %422 = vmatprep.subr.mxu0 0.0
      %423 = vmatpush1.msra.mxu0 0.0
      %424 = vmatprep.subr.mxu0 0.0
      %425 = vmatpush1.msra.mxu0 0.0
      %426 = vmatprep.subr.mxu0 0.0
      %427 = vmatpush1.msra.mxu0 0.0
      %428 = vmatprep.subr.mxu0 0.0
      %429 = vmatpush1.msra.mxu0 0.0
      %430 = vmatprep.subr.mxu0 0.0
      %431 = vmatpush1.msra.mxu0 0.0
      %432 = vmatprep.subr.mxu0 0.0
      %433 = vmatpush1.msra.mxu0 0.0
      %434 = vmatprep.subr.mxu0 0.0
      %435 = vmatpush1.msra.mxu0 0.0
      %436 = vmatprep.subr.mxu0 0.0
      %437 = vmatpush1.msra.mxu0 0.0
      %438 = vmatprep.subr.mxu0 0.0
      %439 = vmatpush1.msra.mxu0 0.0
      %440 = vmatprep.subr.mxu0 0.0
      %441 = vmatpush1.msra.mxu0 0.0
      %442 = vmatprep.subr.mxu0 0.0
      %443 = vmatpush1.msra.mxu0 0.0
      %444 = vmatprep.subr.mxu0 0.0
      %445 = vmatpush1.msra.mxu0 0.0
      %446 = vmatprep.subr.mxu0 0.0
      %447 = vmatpush1.msra.mxu0 0.0
      %448 = vmatprep.subr.mxu0 0.0
      %449 = vmatpush1.msra.mxu0 0.0
      %450 = vmatprep.subr.mxu0 0.0
      %451 = vmatpush1.msra.mxu0 0.0
      %452 = vmatprep.subr.mxu0 0.0
      %453 = vmatpush1.msra.mxu0 0.0
      %454 = vmatprep.subr.mxu0 0.0
      %455 = vmatpush1.msra.mxu0 0.0
      %456 = vmatprep.subr.mxu0 0.0
      %457 = vmatpush1.msra.mxu0 0.0
      %458 = vmatprep.mubr.f32.mxu0 0.0
      %459 = vmatmul.mubr.f32.gmra.mrb[0].mxu0 %v392
      %v460 = vpop.f32.mrb[0].mxu0
      %v461 = vadd.f32 0.0, %v460
      %v462 = vpop.f32.mrb[0].mxu0
      %463 = vdwg.mxu0
      %v466 = vunpack.c.l.s4 1966171168
      %v467 = vunpack.c.0.s8 %v466
      %v468 = vlaneseq
      %v469 = vshrl.u32 %v468, 7
      %v470 = vsub.s32 %v467, %v469
      %v471 = vrot.slane %v461, %v470
      %v472 = vcombine.high %v471, %v471
      %v474 = vunpack.c.l.s4 1966171168
      %v475 = vunpack.c.0.s8 %v474
      %v476 = vlaneseq
      %v477 = vshrl.u32 %v476, 7
      %v478 = vsub.s32 %v475, %v477
      %v479 = vrot.slane %v471, %v478
      %v481 = vunpack.c.l.s4 1966171168
      %v482 = vunpack.c.0.s8 %v481
      %v483 = vlaneseq
      %v484 = vshrl.u32 %v483, 7
      %v485 = vsub.s32 %v482, %v484
      %v486 = vrot.slane %v472, %v485
      %v487 = vcombine.high %v479, %v479
      %v488 = vcombine.high %v486, %v486
      %v489 = vsel %vm206, %v479, 0
      %v492 = vsel %vm206, %v81, 0
      %494 = vmatprep.subr.mxu0 0.0
      %495 = vmatpush1.xpose.msra.mxu0 %v492
      %496 = vmatprep.subr.mxu0 0.0
      %497 = vmatpush1.xpose.msra.mxu0 0.0
      %498 = vmatprep.subr.mxu0 0.0
      %499 = vmatpush1.xpose.msra.mxu0 0.0
      %500 = vmatprep.subr.mxu0 0.0
      %501 = vmatpush1.xpose.msra.mxu0 0.0
      %502 = vmatprep.subr.mxu0 0.0
      %503 = vmatpush1.xpose.msra.mxu0 0.0
      %504 = vmatprep.subr.mxu0 0.0
      %505 = vmatpush1.xpose.msra.mxu0 0.0
      %506 = vmatprep.subr.mxu0 0.0
      %507 = vmatpush1.xpose.msra.mxu0 0.0
      %508 = vmatprep.subr.mxu0 0.0
      %509 = vmatpush1.xpose.msra.mxu0 0.0
      %510 = vmatprep.subr.mxu0 0.0
      %511 = vmatpush1.xpose.msra.mxu0 0.0
      %512 = vmatprep.subr.mxu0 0.0
      %513 = vmatpush1.xpose.msra.mxu0 0.0
      %514 = vmatprep.subr.mxu0 0.0
      %515 = vmatpush1.xpose.msra.mxu0 0.0
      %516 = vmatprep.subr.mxu0 0.0
      %517 = vmatpush1.xpose.msra.mxu0 0.0
      %518 = vmatprep.subr.mxu0 0.0
      %519 = vmatpush1.xpose.msra.mxu0 0.0
      %520 = vmatprep.subr.mxu0 0.0
      %521 = vmatpush1.xpose.msra.mxu0 0.0
      %522 = vmatprep.subr.mxu0 0.0
      %523 = vmatpush1.xpose.msra.mxu0 0.0
      %524 = vmatprep.subr.mxu0 0.0
      %525 = vmatpush1.xpose.msra.mxu0 0.0
      %526 = vmatprep.subr.mxu0 0.0
      %527 = vmatpush1.xpose.msra.mxu0 0.0
      %528 = vmatprep.subr.mxu0 0.0
      %529 = vmatpush1.xpose.msra.mxu0 0.0
      %530 = vmatprep.subr.mxu0 0.0
      %531 = vmatpush1.xpose.msra.mxu0 0.0
      %532 = vmatprep.subr.mxu0 0.0
      %533 = vmatpush1.xpose.msra.mxu0 0.0
      %534 = vmatprep.subr.mxu0 0.0
      %535 = vmatpush1.xpose.msra.mxu0 0.0
      %536 = vmatprep.subr.mxu0 0.0
      %537 = vmatpush1.xpose.msra.mxu0 0.0
      %538 = vmatprep.subr.mxu0 0.0
      %539 = vmatpush1.xpose.msra.mxu0 0.0
      %540 = vmatprep.subr.mxu0 0.0
      %541 = vmatpush1.xpose.msra.mxu0 0.0
      %542 = vmatprep.subr.mxu0 0.0
      %543 = vmatpush1.xpose.msra.mxu0 0.0
      %544 = vmatprep.subr.mxu0 0.0
      %545 = vmatpush1.xpose.msra.mxu0 0.0
      %546 = vmatprep.subr.mxu0 0.0
      %547 = vmatpush1.xpose.msra.mxu0 0.0
      %548 = vmatprep.subr.mxu0 0.0
      %549 = vmatpush1.xpose.msra.mxu0 0.0
      %550 = vmatprep.subr.mxu0 0.0
      %551 = vmatpush1.xpose.msra.mxu0 0.0
      %552 = vmatprep.subr.mxu0 0.0
      %553 = vmatpush1.xpose.msra.mxu0 0.0
      %554 = vmatprep.subr.mxu0 0.0
      %555 = vmatpush1.xpose.msra.mxu0 0.0
      %556 = vmatprep.subr.mxu0 0.0
      %557 = vmatpush1.xpose.msra.mxu0 0.0
      %558 = vmatprep.mubr.f32.mxu0 0.0
      %559 = vmatmul.mubr.f32.gmra.mrb[0].mxu0 %v489
      %v560 = vpop.f32.mrb[0].mxu0
      %v561 = vadd.f32 0.0, %v560
      %v562 = vpop.f32.mrb[0].mxu0
      %563 = vdwg.mxu0
      %v564 = vsel %vm206, %v486, 0
      %v567 = vsel %vm206, %v82, 0
      %569 = vmatprep.subr.mxu0 0.0
      %570 = vmatpush1.xpose.msra.mxu0 %v567
      %571 = vmatprep.subr.mxu0 0.0
      %572 = vmatpush1.xpose.msra.mxu0 0.0
      %573 = vmatprep.subr.mxu0 0.0
      %574 = vmatpush1.xpose.msra.mxu0 0.0
      %575 = vmatprep.subr.mxu0 0.0
      %576 = vmatpush1.xpose.msra.mxu0 0.0
      %577 = vmatprep.subr.mxu0 0.0
      %578 = vmatpush1.xpose.msra.mxu0 0.0
      %579 = vmatprep.subr.mxu0 0.0
      %580 = vmatpush1.xpose.msra.mxu0 0.0
      %581 = vmatprep.subr.mxu0 0.0
      %582 = vmatpush1.xpose.msra.mxu0 0.0
      %583 = vmatprep.subr.mxu0 0.0
      %584 = vmatpush1.xpose.msra.mxu0 0.0
      %585 = vmatprep.subr.mxu0 0.0
      %586 = vmatpush1.xpose.msra.mxu0 0.0
      %587 = vmatprep.subr.mxu0 0.0
      %588 = vmatpush1.xpose.msra.mxu0 0.0
      %589 = vmatprep.subr.mxu0 0.0
      %590 = vmatpush1.xpose.msra.mxu0 0.0
      %591 = vmatprep.subr.mxu0 0.0
      %592 = vmatpush1.xpose.msra.mxu0 0.0
      %593 = vmatprep.subr.mxu0 0.0
      %594 = vmatpush1.xpose.msra.mxu0 0.0
      %595 = vmatprep.subr.mxu0 0.0
      %596 = vmatpush1.xpose.msra.mxu0 0.0
      %597 = vmatprep.subr.mxu0 0.0
      %598 = vmatpush1.xpose.msra.mxu0 0.0
      %599 = vmatprep.subr.mxu0 0.0
      %600 = vmatpush1.xpose.msra.mxu0 0.0
      %601 = vmatprep.subr.mxu0 0.0
      %602 = vmatpush1.xpose.msra.mxu0 0.0
      %603 = vmatprep.subr.mxu0 0.0
      %604 = vmatpush1.xpose.msra.mxu0 0.0
      %605 = vmatprep.subr.mxu0 0.0
      %606 = vmatpush1.xpose.msra.mxu0 0.0
      %607 = vmatprep.subr.mxu0 0.0
      %608 = vmatpush1.xpose.msra.mxu0 0.0
      %609 = vmatprep.subr.mxu0 0.0
      %610 = vmatpush1.xpose.msra.mxu0 0.0
      %611 = vmatprep.subr.mxu0 0.0
      %612 = vmatpush1.xpose.msra.mxu0 0.0
      %613 = vmatprep.subr.mxu0 0.0
      %614 = vmatpush1.xpose.msra.mxu0 0.0
      %615 = vmatprep.subr.mxu0 0.0
      %616 = vmatpush1.xpose.msra.mxu0 0.0
      %617 = vmatprep.subr.mxu0 0.0
      %618 = vmatpush1.xpose.msra.mxu0 0.0
      %619 = vmatprep.subr.mxu0 0.0
      %620 = vmatpush1.xpose.msra.mxu0 0.0
      %621 = vmatprep.subr.mxu0 0.0
      %622 = vmatpush1.xpose.msra.mxu0 0.0
      %623 = vmatprep.subr.mxu0 0.0
      %624 = vmatpush1.xpose.msra.mxu0 0.0
      %625 = vmatprep.subr.mxu0 0.0
      %626 = vmatpush1.xpose.msra.mxu0 0.0
      %627 = vmatprep.subr.mxu0 0.0
      %628 = vmatpush1.xpose.msra.mxu0 0.0
      %629 = vmatprep.subr.mxu0 0.0
      %630 = vmatpush1.xpose.msra.mxu0 0.0
      %631 = vmatprep.subr.mxu0 0.0
      %632 = vmatpush1.xpose.msra.mxu0 0.0
      %633 = vmatprep.mubr.f32.mxu0 0.0
      %634 = vmatmul.mubr.f32.gmra.mrb[0].mxu0 %v564
      %v635 = vpop.f32.mrb[0].mxu0
      %v636 = vadd.f32 0.0, %v635
      %v637 = vpop.f32.mrb[0].mxu0
      %638 = vdwg.mxu0
      %v639 = vsel %vm206, %v487, 0
      %v642 = vsel %vm206, %v83, 0
      %644 = vmatprep.subr.mxu0 0.0
      %645 = vmatpush1.xpose.msra.mxu0 %v642
      %646 = vmatprep.subr.mxu0 0.0
      %647 = vmatpush1.xpose.msra.mxu0 0.0
      %648 = vmatprep.subr.mxu0 0.0
      %649 = vmatpush1.xpose.msra.mxu0 0.0
      %650 = vmatprep.subr.mxu0 0.0
      %651 = vmatpush1.xpose.msra.mxu0 0.0
      %652 = vmatprep.subr.mxu0 0.0
      %653 = vmatpush1.xpose.msra.mxu0 0.0
      %654 = vmatprep.subr.mxu0 0.0
      %655 = vmatpush1.xpose.msra.mxu0 0.0
      %656 = vmatprep.subr.mxu0 0.0
      %657 = vmatpush1.xpose.msra.mxu0 0.0
      %658 = vmatprep.subr.mxu0 0.0
      %659 = vmatpush1.xpose.msra.mxu0 0.0
      %660 = vmatprep.subr.mxu0 0.0
      %661 = vmatpush1.xpose.msra.mxu0 0.0
      %662 = vmatprep.subr.mxu0 0.0
      %663 = vmatpush1.xpose.msra.mxu0 0.0
      %664 = vmatprep.subr.mxu0 0.0
      %665 = vmatpush1.xpose.msra.mxu0 0.0
      %666 = vmatprep.subr.mxu0 0.0
      %667 = vmatpush1.xpose.msra.mxu0 0.0
      %668 = vmatprep.subr.mxu0 0.0
      %669 = vmatpush1.xpose.msra.mxu0 0.0
      %670 = vmatprep.subr.mxu0 0.0
      %671 = vmatpush1.xpose.msra.mxu0 0.0
      %672 = vmatprep.subr.mxu0 0.0
      %673 = vmatpush1.xpose.msra.mxu0 0.0
      %674 = vmatprep.subr.mxu0 0.0
      %675 = vmatpush1.xpose.msra.mxu0 0.0
      %676 = vmatprep.subr.mxu0 0.0
      %677 = vmatpush1.xpose.msra.mxu0 0.0
      %678 = vmatprep.subr.mxu0 0.0
      %679 = vmatpush1.xpose.msra.mxu0 0.0
      %680 = vmatprep.subr.mxu0 0.0
      %681 = vmatpush1.xpose.msra.mxu0 0.0
      %682 = vmatprep.subr.mxu0 0.0
      %683 = vmatpush1.xpose.msra.mxu0 0.0
      %684 = vmatprep.subr.mxu0 0.0
      %685 = vmatpush1.xpose.msra.mxu0 0.0
      %686 = vmatprep.subr.mxu0 0.0
      %687 = vmatpush1.xpose.msra.mxu0 0.0
      %688 = vmatprep.subr.mxu0 0.0
      %689 = vmatpush1.xpose.msra.mxu0 0.0
      %690 = vmatprep.subr.mxu0 0.0
      %691 = vmatpush1.xpose.msra.mxu0 0.0
      %692 = vmatprep.subr.mxu0 0.0
      %693 = vmatpush1.xpose.msra.mxu0 0.0
      %694 = vmatprep.subr.mxu0 0.0
      %695 = vmatpush1.xpose.msra.mxu0 0.0
      %696 = vmatprep.subr.mxu0 0.0
      %697 = vmatpush1.xpose.msra.mxu0 0.0
      %698 = vmatprep.subr.mxu0 0.0
      %699 = vmatpush1.xpose.msra.mxu0 0.0
      %700 = vmatprep.subr.mxu0 0.0
      %701 = vmatpush1.xpose.msra.mxu0 0.0
      %702 = vmatprep.subr.mxu0 0.0
      %703 = vmatpush1.xpose.msra.mxu0 0.0
      %704 = vmatprep.subr.mxu0 0.0
      %705 = vmatpush1.xpose.msra.mxu0 0.0
      %706 = vmatprep.subr.mxu0 0.0
      %707 = vmatpush1.xpose.msra.mxu0 0.0
      %708 = vmatprep.mubr.f32.mxu0 0.0
      %709 = vmatmul.mubr.f32.gmra.mrb[0].mxu0 %v639
      %v710 = vpop.f32.mrb[0].mxu0
      %v711 = vadd.f32 0.0, %v710
      %v712 = vpop.f32.mrb[0].mxu0
      %713 = vdwg.mxu0
      %v714 = vsel %vm206, %v488, 0
      %v717 = vsel %vm206, %v84, 0
      %719 = vmatprep.subr.mxu0 0.0
      %720 = vmatpush1.xpose.msra.mxu0 %v717
      %721 = vmatprep.subr.mxu0 0.0
      %722 = vmatpush1.xpose.msra.mxu0 0.0
      %723 = vmatprep.subr.mxu0 0.0
      %724 = vmatpush1.xpose.msra.mxu0 0.0
      %725 = vmatprep.subr.mxu0 0.0
      %726 = vmatpush1.xpose.msra.mxu0 0.0
      %727 = vmatprep.subr.mxu0 0.0
      %728 = vmatpush1.xpose.msra.mxu0 0.0
      %729 = vmatprep.subr.mxu0 0.0
      %730 = vmatpush1.xpose.msra.mxu0 0.0
      %731 = vmatprep.subr.mxu0 0.0
      %732 = vmatpush1.xpose.msra.mxu0 0.0
      %733 = vmatprep.subr.mxu0 0.0
      %734 = vmatpush1.xpose.msra.mxu0 0.0
      %735 = vmatprep.subr.mxu0 0.0
      %736 = vmatpush1.xpose.msra.mxu0 0.0
      %737 = vmatprep.subr.mxu0 0.0
      %738 = vmatpush1.xpose.msra.mxu0 0.0
      %739 = vmatprep.subr.mxu0 0.0
      %740 = vmatpush1.xpose.msra.mxu0 0.0
      %741 = vmatprep.subr.mxu0 0.0
      %742 = vmatpush1.xpose.msra.mxu0 0.0
      %743 = vmatprep.subr.mxu0 0.0
      %744 = vmatpush1.xpose.msra.mxu0 0.0
      %745 = vmatprep.subr.mxu0 0.0
      %746 = vmatpush1.xpose.msra.mxu0 0.0
      %747 = vmatprep.subr.mxu0 0.0
      %748 = vmatpush1.xpose.msra.mxu0 0.0
      %749 = vmatprep.subr.mxu0 0.0
      %750 = vmatpush1.xpose.msra.mxu0 0.0
      %751 = vmatprep.subr.mxu0 0.0
      %752 = vmatpush1.xpose.msra.mxu0 0.0
      %753 = vmatprep.subr.mxu0 0.0
      %754 = vmatpush1.xpose.msra.mxu0 0.0
      %755 = vmatprep.subr.mxu0 0.0
      %756 = vmatpush1.xpose.msra.mxu0 0.0
      %757 = vmatprep.subr.mxu0 0.0
      %758 = vmatpush1.xpose.msra.mxu0 0.0
      %759 = vmatprep.subr.mxu0 0.0
      %760 = vmatpush1.xpose.msra.mxu0 0.0
      %761 = vmatprep.subr.mxu0 0.0
      %762 = vmatpush1.xpose.msra.mxu0 0.0
      %763 = vmatprep.subr.mxu0 0.0
      %764 = vmatpush1.xpose.msra.mxu0 0.0
      %765 = vmatprep.subr.mxu0 0.0
      %766 = vmatpush1.xpose.msra.mxu0 0.0
      %767 = vmatprep.subr.mxu0 0.0
      %768 = vmatpush1.xpose.msra.mxu0 0.0
      %769 = vmatprep.subr.mxu0 0.0
      %770 = vmatpush1.xpose.msra.mxu0 0.0
      %771 = vmatprep.subr.mxu0 0.0
      %772 = vmatpush1.xpose.msra.mxu0 0.0
      %773 = vmatprep.subr.mxu0 0.0
      %774 = vmatpush1.xpose.msra.mxu0 0.0
      %775 = vmatprep.subr.mxu0 0.0
      %776 = vmatpush1.xpose.msra.mxu0 0.0
      %777 = vmatprep.subr.mxu0 0.0
      %778 = vmatpush1.xpose.msra.mxu0 0.0
      %779 = vmatprep.subr.mxu0 0.0
      %780 = vmatpush1.xpose.msra.mxu0 0.0
      %781 = vmatprep.subr.mxu0 0.0
      %782 = vmatpush1.xpose.msra.mxu0 0.0
      %783 = vmatprep.mubr.f32.mxu0 0.0
      %784 = vmatmul.mubr.f32.gmra.mrb[0].mxu0 %v714
      %v785 = vpop.f32.mrb[0].mxu0
      %v786 = vadd.f32 0.0, %v785
      %v787 = vpop.f32.mrb[0].mxu0
      %788 = vdwg.mxu0
      %v793 = vrot.slane %v636, 7
      %vm794 = vcmask 1041409
      %v795 = vsel %vm794, %v793, %v561
      %v796 = vrot.slane %v711, 6
      %vm797 = vcmask 1042434
      %v798 = vsel %vm797, %v796, %v795
      %v799 = vrot.slane %v786, 5
      %vm800 = vcmask 1043459
      %v801 = vsel %vm800, %v799, %v798
      %vm803 = vcmask 60416
      %v804 = vsel %vm803, %v801, -inf
      %805 = vmax.xlane.f32.xlu0 %v804
      %v806 = vpop.xlane.xlu0 %805
      %v808 = vrot.slane %v806, 1
      %v809 = vrot.slane %v806, 2
      %v810 = vrot.slane %v806, 3
      %v815 = vsub.f32 %v561, %v806
      %v816 = vsub.f32 %v636, %v808
      %v817 = vsub.f32 %v711, %v809
      %v818 = vsub.f32 %v786, %v810
      %v819 = vmul.f32 %v815, 1.442695
      %v820 = vpow.pop %v819
      %v821 = vmul.f32 %v816, 1.442695
      %v822 = vpow.pop %v821
      %v823 = vmul.f32 %v817, 1.442695
      %v824 = vpow.pop %v823
      %v825 = vmul.f32 %v818, 1.442695
      %v826 = vpow.pop %v825
      %v831 = vrot.slane %v822, 7
      %v832 = vsel %vm794, %v831, %v820
      %v833 = vrot.slane %v824, 6
      %v834 = vsel %vm797, %v833, %v832
      %v835 = vrot.slane %v826, 5
      %v836 = vsel %vm800, %v835, %v834
      %v838 = vsel %vm803, %v836, 0.0
      %839 = vadd.xlane.f32.xlu0 %v838
      %v840 = vpop.xlane.xlu0 %839
      %v841 = vrcp.pop %v840
      %v843 = vrot.slane %v841, 1
      %v844 = vrot.slane %v841, 2
      %v845 = vrot.slane %v841, 3
      %v850 = vmul.f32 %v820, %v841
      %v851 = vmul.f32 %v822, %v843
      %v852 = vmul.f32 %v824, %v844
      %v853 = vmul.f32 %v826, %v845
      %vm854 = vcmask 64512
      %v856 = vsel %vm854, %v850, 0
      %858 = vmatprep.subr.mxu0 0.0
      %859 = vmatpush1.msra.mxu0 %v81
      %860 = vmatprep.subr.mxu0 0.0
      %861 = vmatpush1.msra.mxu0 0.0
      %862 = vmatprep.subr.mxu0 0.0
      %863 = vmatpush1.msra.mxu0 0.0
      %864 = vmatprep.subr.mxu0 0.0
      %865 = vmatpush1.msra.mxu0 0.0
      %866 = vmatprep.subr.mxu0 0.0
      %867 = vmatpush1.msra.mxu0 0.0
      %868 = vmatprep.subr.mxu0 0.0
      %869 = vmatpush1.msra.mxu0 0.0
      %870 = vmatprep.subr.mxu0 0.0
      %871 = vmatpush1.msra.mxu0 0.0
      %872 = vmatprep.subr.mxu0 0.0
      %873 = vmatpush1.msra.mxu0 0.0
      %874 = vmatprep.subr.mxu0 0.0
      %875 = vmatpush1.msra.mxu0 0.0
      %876 = vmatprep.subr.mxu0 0.0
      %877 = vmatpush1.msra.mxu0 0.0
      %878 = vmatprep.subr.mxu0 0.0
      %879 = vmatpush1.msra.mxu0 0.0
      %880 = vmatprep.subr.mxu0 0.0
      %881 = vmatpush1.msra.mxu0 0.0
      %882 = vmatprep.subr.mxu0 0.0
      %883 = vmatpush1.msra.mxu0 0.0
      %884 = vmatprep.subr.mxu0 0.0
      %885 = vmatpush1.msra.mxu0 0.0
      %886 = vmatprep.subr.mxu0 0.0
      %887 = vmatpush1.msra.mxu0 0.0
      %888 = vmatprep.subr.mxu0 0.0
      %889 = vmatpush1.msra.mxu0 0.0
      %890 = vmatprep.subr.mxu0 0.0
      %891 = vmatpush1.msra.mxu0 0.0
      %892 = vmatprep.subr.mxu0 0.0
      %893 = vmatpush1.msra.mxu0 0.0
      %894 = vmatprep.subr.mxu0 0.0
      %895 = vmatpush1.msra.mxu0 0.0
      %896 = vmatprep.subr.mxu0 0.0
      %897 = vmatpush1.msra.mxu0 0.0
      %898 = vmatprep.subr.mxu0 0.0
      %899 = vmatpush1.msra.mxu0 0.0
      %900 = vmatprep.subr.mxu0 0.0
      %901 = vmatpush1.msra.mxu0 0.0
      %902 = vmatprep.subr.mxu0 0.0
      %903 = vmatpush1.msra.mxu0 0.0
      %904 = vmatprep.subr.mxu0 0.0
      %905 = vmatpush1.msra.mxu0 0.0
      %906 = vmatprep.subr.mxu0 0.0
      %907 = vmatpush1.msra.mxu0 0.0
      %908 = vmatprep.subr.mxu0 0.0
      %909 = vmatpush1.msra.mxu0 0.0
      %910 = vmatprep.subr.mxu0 0.0
      %911 = vmatpush1.msra.mxu0 0.0
      %912 = vmatprep.subr.mxu0 0.0
      %913 = vmatpush1.msra.mxu0 0.0
      %914 = vmatprep.subr.mxu0 0.0
      %915 = vmatpush1.msra.mxu0 0.0
      %916 = vmatprep.subr.mxu0 0.0
      %917 = vmatpush1.msra.mxu0 0.0
      %918 = vmatprep.subr.mxu0 0.0
      %919 = vmatpush1.msra.mxu0 0.0
      %920 = vmatprep.subr.mxu0 0.0
      %921 = vmatpush1.msra.mxu0 0.0
      %922 = vmatprep.mubr.f32.mxu0 0.0
      %923 = vmatmul.mubr.f32.gmra.mrb[0].mxu0 %v856
      %v924 = vpop.f32.mrb[0].mxu0
      %v925 = vadd.f32 0.0, %v924
      %v926 = vpop.f32.mrb[0].mxu0
      %927 = vdwg.mxu0
      %v929 = vsel %vm854, %v851, 0
      %931 = vmatprep.subr.mxu0 0.0
      %932 = vmatpush1.msra.mxu0 %v82
      %933 = vmatprep.subr.mxu0 0.0
      %934 = vmatpush1.msra.mxu0 0.0
      %935 = vmatprep.subr.mxu0 0.0
      %936 = vmatpush1.msra.mxu0 0.0
      %937 = vmatprep.subr.mxu0 0.0
      %938 = vmatpush1.msra.mxu0 0.0
      %939 = vmatprep.subr.mxu0 0.0
      %940 = vmatpush1.msra.mxu0 0.0
      %941 = vmatprep.subr.mxu0 0.0
      %942 = vmatpush1.msra.mxu0 0.0
      %943 = vmatprep.subr.mxu0 0.0
      %944 = vmatpush1.msra.mxu0 0.0
      %945 = vmatprep.subr.mxu0 0.0
      %946 = vmatpush1.msra.mxu0 0.0
      %947 = vmatprep.subr.mxu0 0.0
      %948 = vmatpush1.msra.mxu0 0.0
      %949 = vmatprep.subr.mxu0 0.0
      %950 = vmatpush1.msra.mxu0 0.0
      %951 = vmatprep.subr.mxu0 0.0
      %952 = vmatpush1.msra.mxu0 0.0
      %953 = vmatprep.subr.mxu0 0.0
      %954 = vmatpush1.msra.mxu0 0.0
      %955 = vmatprep.subr.mxu0 0.0
      %956 = vmatpush1.msra.mxu0 0.0
      %957 = vmatprep.subr.mxu0 0.0
      %958 = vmatpush1.msra.mxu0 0.0
      %959 = vmatprep.subr.mxu0 0.0
      %960 = vmatpush1.msra.mxu0 0.0
      %961 = vmatprep.subr.mxu0 0.0
      %962 = vmatpush1.msra.mxu0 0.0
      %963 = vmatprep.subr.mxu0 0.0
      %964 = vmatpush1.msra.mxu0 0.0
      %965 = vmatprep.subr.mxu0 0.0
      %966 = vmatpush1.msra.mxu0 0.0
      %967 = vmatprep.subr.mxu0 0.0
      %968 = vmatpush1.msra.mxu0 0.0
      %969 = vmatprep.subr.mxu0 0.0
      %970 = vmatpush1.msra.mxu0 0.0
      %971 = vmatprep.subr.mxu0 0.0
      %972 = vmatpush1.msra.mxu0 0.0
      %973 = vmatprep.subr.mxu0 0.0
      %974 = vmatpush1.msra.mxu0 0.0
      %975 = vmatprep.subr.mxu0 0.0
      %976 = vmatpush1.msra.mxu0 0.0
      %977 = vmatprep.subr.mxu0 0.0
      %978 = vmatpush1.msra.mxu0 0.0
      %979 = vmatprep.subr.mxu0 0.0
      %980 = vmatpush1.msra.mxu0 0.0
      %981 = vmatprep.subr.mxu0 0.0
      %982 = vmatpush1.msra.mxu0 0.0
      %983 = vmatprep.subr.mxu0 0.0
      %984 = vmatpush1.msra.mxu0 0.0
      %985 = vmatprep.subr.mxu0 0.0
      %986 = vmatpush1.msra.mxu0 0.0
      %987 = vmatprep.subr.mxu0 0.0
      %988 = vmatpush1.msra.mxu0 0.0
      %989 = vmatprep.subr.mxu0 0.0
      %990 = vmatpush1.msra.mxu0 0.0
      %991 = vmatprep.subr.mxu0 0.0
      %992 = vmatpush1.msra.mxu0 0.0
      %993 = vmatprep.subr.mxu0 0.0
      %994 = vmatpush1.msra.mxu0 0.0
      %995 = vmatprep.mubr.f32.mxu0 0.0
      %996 = vmatmul.mubr.f32.gmra.mrb[0].mxu0 %v929
      %v997 = vpop.f32.mrb[0].mxu0
      %v998 = vadd.f32 0.0, %v997
      %v999 = vpop.f32.mrb[0].mxu0
      %1000 = vdwg.mxu0
      %v1002 = vsel %vm854, %v852, 0
      %1004 = vmatprep.subr.mxu0 0.0
      %1005 = vmatpush1.msra.mxu0 %v83
      %1006 = vmatprep.subr.mxu0 0.0
      %1007 = vmatpush1.msra.mxu0 0.0
      %1008 = vmatprep.subr.mxu0 0.0
      %1009 = vmatpush1.msra.mxu0 0.0
      %1010 = vmatprep.subr.mxu0 0.0
      %1011 = vmatpush1.msra.mxu0 0.0
      %1012 = vmatprep.subr.mxu0 0.0
      %1013 = vmatpush1.msra.mxu0 0.0
      %1014 = vmatprep.subr.mxu0 0.0
      %1015 = vmatpush1.msra.mxu0 0.0
      %1016 = vmatprep.subr.mxu0 0.0
      %1017 = vmatpush1.msra.mxu0 0.0
      %1018 = vmatprep.subr.mxu0 0.0
      %1019 = vmatpush1.msra.mxu0 0.0
      %1020 = vmatprep.subr.mxu0 0.0
      %1021 = vmatpush1.msra.mxu0 0.0
      %1022 = vmatprep.subr.mxu0 0.0
      %1023 = vmatpush1.msra.mxu0 0.0
      %1024 = vmatprep.subr.mxu0 0.0
      %1025 = vmatpush1.msra.mxu0 0.0
      %1026 = vmatprep.subr.mxu0 0.0
      %1027 = vmatpush1.msra.mxu0 0.0
      %1028 = vmatprep.subr.mxu0 0.0
      %1029 = vmatpush1.msra.mxu0 0.0
      %1030 = vmatprep.subr.mxu0 0.0
      %1031 = vmatpush1.msra.mxu0 0.0
      %1032 = vmatprep.subr.mxu0 0.0
      %1033 = vmatpush1.msra.mxu0 0.0
      %1034 = vmatprep.subr.mxu0 0.0
      %1035 = vmatpush1.msra.mxu0 0.0
      %1036 = vmatprep.subr.mxu0 0.0
      %1037 = vmatpush1.msra.mxu0 0.0
      %1038 = vmatprep.subr.mxu0 0.0
      %1039 = vmatpush1.msra.mxu0 0.0
      %1040 = vmatprep.subr.mxu0 0.0
      %1041 = vmatpush1.msra.mxu0 0.0
      %1042 = vmatprep.subr.mxu0 0.0
      %1043 = vmatpush1.msra.mxu0 0.0
      %1044 = vmatprep.subr.mxu0 0.0
      %1045 = vmatpush1.msra.mxu0 0.0
      %1046 = vmatprep.subr.mxu0 0.0
      %1047 = vmatpush1.msra.mxu0 0.0
      %1048 = vmatprep.subr.mxu0 0.0
      %1049 = vmatpush1.msra.mxu0 0.0
      %1050 = vmatprep.subr.mxu0 0.0
      %1051 = vmatpush1.msra.mxu0 0.0
      %1052 = vmatprep.subr.mxu0 0.0
      %1053 = vmatpush1.msra.mxu0 0.0
      %1054 = vmatprep.subr.mxu0 0.0
      %1055 = vmatpush1.msra.mxu0 0.0
      %1056 = vmatprep.subr.mxu0 0.0
      %1057 = vmatpush1.msra.mxu0 0.0
      %1058 = vmatprep.subr.mxu0 0.0
      %1059 = vmatpush1.msra.mxu0 0.0
      %1060 = vmatprep.subr.mxu0 0.0
      %1061 = vmatpush1.msra.mxu0 0.0
      %1062 = vmatprep.subr.mxu0 0.0
      %1063 = vmatpush1.msra.mxu0 0.0
      %1064 = vmatprep.subr.mxu0 0.0
      %1065 = vmatpush1.msra.mxu0 0.0
      %1066 = vmatprep.subr.mxu0 0.0
      %1067 = vmatpush1.msra.mxu0 0.0
      %1068 = vmatprep.mubr.f32.mxu0 0.0
      %1069 = vmatmul.mubr.f32.gmra.mrb[0].mxu0 %v1002
      %v1070 = vpop.f32.mrb[0].mxu0
      %v1071 = vadd.f32 0.0, %v1070
      %v1072 = vpop.f32.mrb[0].mxu0
      %1073 = vdwg.mxu0
      %v1075 = vsel %vm854, %v853, 0
      %1077 = vmatprep.subr.mxu0 0.0
      %1078 = vmatpush1.msra.mxu0 %v84
      %1079 = vmatprep.subr.mxu0 0.0
      %1080 = vmatpush1.msra.mxu0 0.0
      %1081 = vmatprep.subr.mxu0 0.0
      %1082 = vmatpush1.msra.mxu0 0.0
      %1083 = vmatprep.subr.mxu0 0.0
      %1084 = vmatpush1.msra.mxu0 0.0
      %1085 = vmatprep.subr.mxu0 0.0
      %1086 = vmatpush1.msra.mxu0 0.0
      %1087 = vmatprep.subr.mxu0 0.0
      %1088 = vmatpush1.msra.mxu0 0.0
      %1089 = vmatprep.subr.mxu0 0.0
      %1090 = vmatpush1.msra.mxu0 0.0
      %1091 = vmatprep.subr.mxu0 0.0
      %1092 = vmatpush1.msra.mxu0 0.0
      %1093 = vmatprep.subr.mxu0 0.0
      %1094 = vmatpush1.msra.mxu0 0.0
      %1095 = vmatprep.subr.mxu0 0.0
      %1096 = vmatpush1.msra.mxu0 0.0
      %1097 = vmatprep.subr.mxu0 0.0
      %1098 = vmatpush1.msra.mxu0 0.0
      %1099 = vmatprep.subr.mxu0 0.0
      %1100 = vmatpush1.msra.mxu0 0.0
      %1101 = vmatprep.subr.mxu0 0.0
      %1102 = vmatpush1.msra.mxu0 0.0
      %1103 = vmatprep.subr.mxu0 0.0
      %1104 = vmatpush1.msra.mxu0 0.0
      %1105 = vmatprep.subr.mxu0 0.0
      %1106 = vmatpush1.msra.mxu0 0.0
      %1107 = vmatprep.subr.mxu0 0.0
      %1108 = vmatpush1.msra.mxu0 0.0
      %1109 = vmatprep.subr.mxu0 0.0
      %1110 = vmatpush1.msra.mxu0 0.0
      %1111 = vmatprep.subr.mxu0 0.0
      %1112 = vmatpush1.msra.mxu0 0.0
      %1113 = vmatprep.subr.mxu0 0.0
      %1114 = vmatpush1.msra.mxu0 0.0
      %1115 = vmatprep.subr.mxu0 0.0
      %1116 = vmatpush1.msra.mxu0 0.0
      %1117 = vmatprep.subr.mxu0 0.0
      %1118 = vmatpush1.msra.mxu0 0.0
      %1119 = vmatprep.subr.mxu0 0.0
      %1120 = vmatpush1.msra.mxu0 0.0
      %1121 = vmatprep.subr.mxu0 0.0
      %1122 = vmatpush1.msra.mxu0 0.0
      %1123 = vmatprep.subr.mxu0 0.0
      %1124 = vmatpush1.msra.mxu0 0.0
      %1125 = vmatprep.subr.mxu0 0.0
      %1126 = vmatpush1.msra.mxu0 0.0
      %1127 = vmatprep.subr.mxu0 0.0
      %1128 = vmatpush1.msra.mxu0 0.0
      %1129 = vmatprep.subr.mxu0 0.0
      %1130 = vmatpush1.msra.mxu0 0.0
      %1131 = vmatprep.subr.mxu0 0.0
      %1132 = vmatpush1.msra.mxu0 0.0
      %1133 = vmatprep.subr.mxu0 0.0
      %1134 = vmatpush1.msra.mxu0 0.0
      %1135 = vmatprep.subr.mxu0 0.0
      %1136 = vmatpush1.msra.mxu0 0.0
      %1137 = vmatprep.subr.mxu0 0.0
      %1138 = vmatpush1.msra.mxu0 0.0
      %1139 = vmatprep.subr.mxu0 0.0
      %1140 = vmatpush1.msra.mxu0 0.0
      %1141 = vmatprep.mubr.f32.mxu0 0.0
      %1142 = vmatmul.mubr.f32.gmra.mrb[0].mxu0 %v1075
      %v1143 = vpop.f32.mrb[0].mxu0
      %v1144 = vadd.f32 0.0, %v1143
      %v1145 = vpop.f32.mrb[0].mxu0
      %1146 = vdwg.mxu0
      %1147 = vmatprep.subr.mxu0 0.0
      %1148 = vmatpush1.msra.mxu0 %v105
      %1149 = vmatprep.subr.mxu0 0.0
      %1150 = vmatpush1.msra.mxu0 %v106
      %1151 = vmatprep.subr.mxu0 0.0
      %1152 = vmatpush1.msra.mxu0 %v107
      %1153 = vmatprep.subr.mxu0 0.0
      %1154 = vmatpush1.msra.mxu0 %v108
      %1155 = vmatprep.subr.mxu0 0.0
      %1156 = vmatpush1.msra.mxu0 0.0
      %1157 = vmatprep.subr.mxu0 0.0
      %1158 = vmatpush1.msra.mxu0 0.0
      %1159 = vmatprep.subr.mxu0 0.0
      %1160 = vmatpush1.msra.mxu0 0.0
      %1161 = vmatprep.subr.mxu0 0.0
      %1162 = vmatpush1.msra.mxu0 0.0
      %1163 = vmatprep.subr.mxu0 0.0
      %1164 = vmatpush1.msra.mxu0 0.0
      %1165 = vmatprep.subr.mxu0 0.0
      %1166 = vmatpush1.msra.mxu0 0.0
      %1167 = vmatprep.subr.mxu0 0.0
      %1168 = vmatpush1.msra.mxu0 0.0
      %1169 = vmatprep.subr.mxu0 0.0
      %1170 = vmatpush1.msra.mxu0 0.0
      %1171 = vmatprep.subr.mxu0 0.0
      %1172 = vmatpush1.msra.mxu0 0.0
      %1173 = vmatprep.subr.mxu0 0.0
      %1174 = vmatpush1.msra.mxu0 0.0
      %1175 = vmatprep.subr.mxu0 0.0
      %1176 = vmatpush1.msra.mxu0 0.0
      %1177 = vmatprep.subr.mxu0 0.0
      %1178 = vmatpush1.msra.mxu0 0.0
      %1179 = vmatprep.subr.mxu0 0.0
      %1180 = vmatpush1.msra.mxu0 0.0
      %1181 = vmatprep.subr.mxu0 0.0
      %1182 = vmatpush1.msra.mxu0 0.0
      %1183 = vmatprep.subr.mxu0 0.0
      %1184 = vmatpush1.msra.mxu0 0.0
      %1185 = vmatprep.subr.mxu0 0.0
      %1186 = vmatpush1.msra.mxu0 0.0
      %1187 = vmatprep.subr.mxu0 0.0
      %1188 = vmatpush1.msra.mxu0 0.0
      %1189 = vmatprep.subr.mxu0 0.0
      %1190 = vmatpush1.msra.mxu0 0.0
      %1191 = vmatprep.subr.mxu0 0.0
      %1192 = vmatpush1.msra.mxu0 0.0
      %1193 = vmatprep.subr.mxu0 0.0
      %1194 = vmatpush1.msra.mxu0 0.0
      %1195 = vmatprep.subr.mxu0 0.0
      %1196 = vmatpush1.msra.mxu0 0.0
      %1197 = vmatprep.subr.mxu0 0.0
      %1198 = vmatpush1.msra.mxu0 0.0
      %1199 = vmatprep.subr.mxu0 0.0
      %1200 = vmatpush1.msra.mxu0 0.0
      %1201 = vmatprep.subr.mxu0 0.0
      %1202 = vmatpush1.msra.mxu0 0.0
      %1203 = vmatprep.subr.mxu0 0.0
      %1204 = vmatpush1.msra.mxu0 0.0
      %1205 = vmatprep.subr.mxu0 0.0
      %1206 = vmatpush1.msra.mxu0 0.0
      %1207 = vmatprep.subr.mxu0 0.0
      %1208 = vmatpush1.msra.mxu0 0.0
      %1209 = vmatprep.subr.mxu0 0.0
      %1210 = vmatpush1.msra.mxu0 0.0
      %1211 = vmatprep.mubr.f32.mxu0 0.0
      %1212 = vmatmul.mubr.f32.gmra.mrb[0].mxu0 %v392
      %v1213 = vpop.f32.mrb[0].mxu0
      %v1214 = vadd.f32 0.0, %v1213
      %v1215 = vpop.f32.mrb[0].mxu0
      %1216 = vdwg.mxu0
      %v1221 = vrot.slane %v998, 7
      %v1222 = vsel %vm794, %v1221, %v925
      %v1223 = vrot.slane %v1071, 6
      %v1224 = vsel %vm797, %v1223, %v1222
      %v1225 = vrot.slane %v1144, 5
      %v1226 = vsel %vm800, %v1225, %v1224
      %v1227 = vsel %vm206, %v1226, 0
      %1229 = vmatprep.subr.mxu0 0.0
      %1230 = vmatpush1.msra.mxu0 %v101
      %1231 = vmatprep.subr.mxu0 0.0
      %1232 = vmatpush1.msra.mxu0 %v102
      %1233 = vmatprep.subr.mxu0 0.0
      %1234 = vmatpush1.msra.mxu0 %v103
      %1235 = vmatprep.subr.mxu0 0.0
      %1236 = vmatpush1.msra.mxu0 %v104
      %1237 = vmatprep.subr.mxu0 0.0
      %1238 = vmatpush1.msra.mxu0 0.0
      %1239 = vmatprep.subr.mxu0 0.0
      %1240 = vmatpush1.msra.mxu0 0.0
      %1241 = vmatprep.subr.mxu0 0.0
      %1242 = vmatpush1.msra.mxu0 0.0
      %1243 = vmatprep.subr.mxu0 0.0
      %1244 = vmatpush1.msra.mxu0 0.0
      %1245 = vmatprep.subr.mxu0 0.0
      %1246 = vmatpush1.msra.mxu0 0.0
      %1247 = vmatprep.subr.mxu0 0.0
      %1248 = vmatpush1.msra.mxu0 0.0
      %1249 = vmatprep.subr.mxu0 0.0
      %1250 = vmatpush1.msra.mxu0 0.0
      %1251 = vmatprep.subr.mxu0 0.0
      %1252 = vmatpush1.msra.mxu0 0.0
      %1253 = vmatprep.subr.mxu0 0.0
      %1254 = vmatpush1.msra.mxu0 0.0
      %1255 = vmatprep.subr.mxu0 0.0
      %1256 = vmatpush1.msra.mxu0 0.0
      %1257 = vmatprep.subr.mxu0 0.0
      %1258 = vmatpush1.msra.mxu0 0.0
      %1259 = vmatprep.subr.mxu0 0.0
      %1260 = vmatpush1.msra.mxu0 0.0
      %1261 = vmatprep.subr.mxu0 0.0
      %1262 = vmatpush1.msra.mxu0 0.0
      %1263 = vmatprep.subr.mxu0 0.0
      %1264 = vmatpush1.msra.mxu0 0.0
      %1265 = vmatprep.subr.mxu0 0.0
      %1266 = vmatpush1.msra.mxu0 0.0
      %1267 = vmatprep.subr.mxu0 0.0
      %1268 = vmatpush1.msra.mxu0 0.0
      %1269 = vmatprep.subr.mxu0 0.0
      %1270 = vmatpush1.msra.mxu0 0.0
      %1271 = vmatprep.subr.mxu0 0.0
      %1272 = vmatpush1.msra.mxu0 0.0
      %1273 = vmatprep.subr.mxu0 0.0
      %1274 = vmatpush1.msra.mxu0 0.0
      %1275 = vmatprep.subr.mxu0 0.0
      %1276 = vmatpush1.msra.mxu0 0.0
      %1277 = vmatprep.subr.mxu0 0.0
      %1278 = vmatpush1.msra.mxu0 0.0
      %1279 = vmatprep.subr.mxu0 0.0
      %1280 = vmatpush1.msra.mxu0 0.0
      %1281 = vmatprep.subr.mxu0 0.0
      %1282 = vmatpush1.msra.mxu0 0.0
      %1283 = vmatprep.subr.mxu0 0.0
      %1284 = vmatpush1.msra.mxu0 0.0
      %1285 = vmatprep.subr.mxu0 0.0
      %1286 = vmatpush1.msra.mxu0 0.0
      %1287 = vmatprep.subr.mxu0 0.0
      %1288 = vmatpush1.msra.mxu0 0.0
      %1289 = vmatprep.subr.mxu0 0.0
      %1290 = vmatpush1.msra.mxu0 0.0
      %1291 = vmatprep.subr.mxu0 0.0
      %1292 = vmatpush1.msra.mxu0 0.0
      %1293 = vmatprep.mubr.f32.mxu0 0.0
      %1294 = vmatmul.mubr.f32.gmra.mrb[0].mxu0 %v1227
      %v1295 = vpop.f32.mrb[0].mxu0
      %v1296 = vadd.f32 %v1214, %v1295
      %v1297 = vpop.f32.mrb[0].mxu0
      %1298 = vdwg.mxu0
      %v1299 = vtanh.pop %v1296
      %s1300 = scalar_lea.vmem [#allocation8], %s123
      %vm1301 = vcmask 257024
      %1302 = vst.msk [vmem:[%s1300] sm:$0xf] %vm1301, %v1299
    $region58: #{tpu_custom_call.1} parent=1 // loop_footer
      %s116 = sadd.s32 1, %s112
    $region59: #{tpu_custom_call.1} parent=1 // loop_footer_branch
      %111 = sbr.rel target = $region55
    $region60: #{tpu_custom_call.1} parent=1 // loop_exit
      _
    %vm1304 = vcmask 257024
    %1305 = vst.msk [vmem:[#allocation9] sm:$0xf] %vm1304, %v117
    %v1310 = vrot.slane %v120, 7
    %vm1311 = vcmask 1041409
    %v1312 = vsel %vm1311, %v1310, %v119
    %v1313 = vrot.slane %v121, 6
    %vm1314 = vcmask 1042434
    %v1315 = vsel %vm1314, %v1313, %v1312
    %v1316 = vrot.slane %v122, 5
    %vm1317 = vcmask 1043459
    %v1318 = vsel %vm1317, %v1316, %v1315
    %vm1320 = vcmask 60416
    %1321 = vst.msk [vmem:[#allocation11] sm:$0xf] %vm1320, %v1318
    // Predicated region
    $region61: #{tpu_custom_call.1} parent=1 // pred_check
      _
    $region62: #{tpu_custom_call.1} parent=1 // pred_check_branch
      %1323 = sbr.rel (0) target = $region64
    $region63: #{tpu_custom_call.1} parent=1 // pred_region
      %s1325 = ssub.s32 512, 512
      %1326 = vsyncadd [#allocation4], %s1325
      %s1327 = sshll.u32 [#allocation8], 4
      %s1328 = int_to_ptr.vmem [resolvable:$true] %s1327
      %1333 = dma.vmem_to_hbm [thread:$0]  %s1328, 512, %s10, [#allocation4], 64, 64, 4
    $region64: #{tpu_custom_call.1} parent=1 // pred_fallthru
      _
    // Predicated region
    $region65: #{tpu_custom_call.1} parent=1 // pred_check
      _
    $region66: #{tpu_custom_call.1} parent=1 // pred_check_branch
      %1335 = sbr.rel (0) target = $region68
    $region67: #{tpu_custom_call.1} parent=1 // pred_region
      %s1337 = ssub.s32 64, 64
      %1338 = vsyncadd [#allocation10], %s1337
      %s1340 = sshll.u32 [#allocation9], 4
      %s1341 = int_to_ptr.vmem [resolvable:$true] %s1340
      %1343 = dma.vmem_to_hbm [thread:$0]  %s1341, 64, %s11, [#allocation10]
    $region68: #{tpu_custom_call.1} parent=1 // pred_fallthru
      _
    // Predicated region
    $region69: #{tpu_custom_call.1} parent=1 // pred_check
      _
    $region70: #{tpu_custom_call.1} parent=1 // pred_check_branch
      %1345 = sbr.rel (0) target = $region72
    $region71: #{tpu_custom_call.1} parent=1 // pred_region
      %s1347 = ssub.s32 64, 64
      %1348 = vsyncadd [#allocation10], %s1347
      %s1350 = sshll.u32 [#allocation11], 4
      %s1351 = int_to_ptr.vmem [resolvable:$true] %s1350
      %1353 = dma.vmem_to_hbm [thread:$0]  %s1351, 64, %s12, [#allocation10]
    $region72: #{tpu_custom_call.1} parent=1 // pred_fallthru
      _
    // Predicated region
    $region73: #{tpu_custom_call.1} parent=1 // pred_check
      _
    $region74: #{tpu_custom_call.1} parent=1 // pred_check_branch
      %1355 = sbr.rel (0) target = $region76
    $region75: #{tpu_custom_call.1} parent=1 // pred_region
      %1356 = dma.done [#allocation4], 512
    $region76: #{tpu_custom_call.1} parent=1 // pred_fallthru
      _
    // Predicated region
    $region77: #{tpu_custom_call.1} parent=1 // pred_check
      _
    $region78: #{tpu_custom_call.1} parent=1 // pred_check_branch
      %1358 = sbr.rel (0) target = $region80
    $region79: #{tpu_custom_call.1} parent=1 // pred_region
      %1359 = dma.done [#allocation10], 64
    $region80: #{tpu_custom_call.1} parent=1 // pred_fallthru
      _
    // Predicated region
    $region81: #{tpu_custom_call.1} parent=1 // pred_check
      _
    $region82: #{tpu_custom_call.1} parent=1 // pred_check_branch
      %1361 = sbr.rel (0) target = $region84
    $region83: #{tpu_custom_call.1} parent=1 // pred_region
      %1362 = dma.done [#allocation10], 64
    $region84: #{tpu_custom_call.1} parent=1 // pred_fallthru
      _
    %1363 = vsyncpa [#allocation3], 1
    %1364 = vsyncpa [#allocation6], 1
    %1365 = vsyncpa [#allocation4], 1
    %1366 = vsyncpa [#allocation10], 1

</llo_original>
